<compile_context>
chip_gen: v7x
topology: tpu7x:2x2x1
jax: 0.10.0
libtpu: 0.0.40
codegen_flags: <defaults>
</compile_context>

<pallas_src>
import jax
import jax.numpy as jnp
from jax.experimental import pallas as pl
from jax.experimental.pallas import tpu as pltpu

# ---- problem sizes (module defaults / small test shapes) --------------------
B = 2            # batch
T = 16           # sequence length
D = 32           # d_model
NH = 2           # n_head
DK = 16          # d_k
DV = 16          # d_v
C = 8            # d_hid1 == d_hid2 == in_ch == out_ch (module default 8)
K = 9            # depthwise kernel size (module default 9)
PAD = (K - 1) // 2
BT = B * T
LN_EPS = 1e-5
NORM_EPS = 1e-12

# ---- parameter-slab layout: one (112, 128) bf16 slab, one DMA ----------------
SLAB_LANES = 128
R_WQKV = 0          # rows 0..31,  lanes 0:96   fused Wq|Wk|Wv  (D, 3*NH*DK)
R_WO = 0            # rows 0..31,  lanes 96:128 Wo              (NH*DV, D)
R_W1 = 32           # rows 32..63, lanes 0:8    W1              (D, C)
R_W2 = 64           # rows 64..71, lanes 0:32   W2              (C, D)
R_PWB = 80          # rows 80..95, lanes 0:16   block-diag pointwise (B*C, B*C)
R_DW = 96           # rows 96..104,lanes 0:16   depthwise taps  (K, B*C)
R_VEC0 = 105        # bqkv lanes 0:96 | bo lanes 96:128
R_VEC1 = 106        # ln0g 0:32 | ln0b 32:64 | ln1g 64:96 | ln1b 96:128
R_VEC2 = 107        # b1 0:8 | b2 8:40 | d_b 40:56 | p_b 56:72
SLAB_ROWS = 112


def _layernorm(y, g, b):
    mu = jnp.mean(y, axis=-1, keepdims=True)
    var = jnp.mean((y - mu) ** 2, axis=-1, keepdims=True)
    return (y - mu) * jax.lax.rsqrt(var + LN_EPS) * g + b


def scfft_kernel(x_ref, w_ref, out_ref, attn_ref):
    f32, bf16 = jnp.float32, jnp.bfloat16
    x = x_ref[...]                                              # (BT, D) f32

    # ---------------- Multi-head self attention ----------------
    # TODO(synk): MultiHeadAttention source not provided; per-head SDPA + output
    #             projection + residual (no internal LayerNorm, no mask) is assumed.
    wqkv = w_ref[R_WQKV:R_WQKV + D, 0:3 * NH * DK]              # (32, 96) bf16
    bqkv = w_ref[R_VEC0:R_VEC0 + 1, 0:3 * NH * DK].astype(f32)
    qkv = jnp.dot(x.astype(bf16), wqkv, preferred_element_type=f32) + bqkv   # (BT, 96)
    qkv_bf = qkv.astype(bf16)

    wo = w_ref[R_WO:R_WO + NH * DV, 96:96 + D]                  # (32, 32) bf16
    bo = w_ref[R_VEC0:R_VEC0 + 1, 96:96 + D].astype(f32)        # (1, 32)

    scale = 1.0 / jnp.sqrt(jnp.float32(DK))
    mha_rows = []
    for b in range(B):                                          # static, B = 2
        r0 = b * T
        acc_b = x[r0:r0 + T, :] + bo                            # residual + Wo bias
        for h in range(NH):                                     # static, NH = 2
            qh = qkv_bf[r0:r0 + T, h * DK:(h + 1) * DK]
            kh = qkv_bf[r0:r0 + T, NH * DK + h * DK:NH * DK + (h + 1) * DK]
            vh = qkv_bf[r0:r0 + T, 2 * NH * DK + h * DV:2 * NH * DK + (h + 1) * DV]
            s = jnp.dot(qh, kh.T, preferred_element_type=f32) * scale
            s = s - jnp.max(s, axis=-1, keepdims=True)
            e = jnp.exp(s)
            a = e * pl.reciprocal(jnp.sum(e, axis=-1, keepdims=True), approx=True)
            attn_ref[(b * NH + h) * T:(b * NH + h + 1) * T, :] = a
            ctx = jnp.dot(a.astype(bf16), vh, preferred_element_type=f32)    # (T, DV)
            # accumulate the Wo projection per head (no ctx scratch round trip)
            acc_b = acc_b + jnp.dot(ctx.astype(bf16), wo[h * DV:(h + 1) * DV, :],
                                    preferred_element_type=f32)
        mha_rows.append(acc_b)
    mha = jnp.concatenate(mha_rows, axis=0)                     # (BT, D), 16-row aligned

    ln0g = w_ref[R_VEC1:R_VEC1 + 1, 0:D].astype(f32)
    ln0b = w_ref[R_VEC1:R_VEC1 + 1, D:2 * D].astype(f32)
    resid = _layernorm(mha, ln0g, ln0b)                         # ln_0; mask is None

    # ---------------- SCPositionwiseFeedForward_low ----------------
    w1 = w_ref[R_W1:R_W1 + D, 0:C]                              # (32, 8) bf16
    b1 = w_ref[R_VEC2:R_VEC2 + 1, 0:C].astype(f32)
    h1 = jnp.dot(resid.astype(bf16), w1, preferred_element_type=f32) + b1    # (BT, C)
    h1 = h1 * jnp.tanh(jax.nn.softplus(h1))                     # Mish

    # batch folded onto the lane axis: (T, B*C) = (16, 16)
    h1_tc = jnp.concatenate([h1[b * T:(b + 1) * T, :] for b in range(B)], axis=1)

    # depthwise conv along T via sublane rolls + iota masks (weights already hold
    # the F.normalize * gain * literal-x-T factor, see _pack_params)
    dw = w_ref[R_DW:R_DW + K, 0:B * C].astype(f32)              # (K, B*C)
    db = w_ref[R_VEC2:R_VEC2 + 1, 40:40 + B * C].astype(f32)    # (1, B*C)
    t_idx = jax.lax.broadcasted_iota(jnp.int32, (T, B * C), 0)
    acc = jnp.broadcast_to(db, (T, B * C))
    for kk in range(K):                                         # static unroll over taps
        off = kk - PAD
        if off == 0:
            win = h1_tc
        else:
            win = pltpu.roll(h1_tc, shift=(-off) % T, axis=0)   # XLU sublane rotate
            mask = (t_idx < T - off) if off > 0 else (t_idx >= -off)
            win = jnp.where(mask, win, 0.0)
        acc = acc + win * dw[kk:kk + 1, :]

    # pointwise conv (literal einsum 'bct,bco->bot'): block-diagonal weight gives both
    # batches in one (T, B*C) @ (B*C, B*C) matmul
    pwb = w_ref[R_PWB:R_PWB + B * C, 0:B * C]                   # (16, 16) bf16
    pb = w_ref[R_VEC2:R_VEC2 + 1, 56:56 + B * C].astype(f32)
    pt = jnp.dot(acc.astype(bf16), pwb, preferred_element_type=f32) + pb     # (T, B*C)

    # w_2 projection + residual + ln_1, per batch, written straight to output rows
    w2 = w_ref[R_W2:R_W2 + C, 0:D]                              # (8, 32) bf16
    b2 = w_ref[R_VEC2:R_VEC2 + 1, 8:8 + D].astype(f32)
    ln1g = w_ref[R_VEC1:R_VEC1 + 1, 2 * D:3 * D].astype(f32)
    ln1b = w_ref[R_VEC1:R_VEC1 + 1, 3 * D:4 * D].astype(f32)
    for b in range(B):                                          # static, B = 2
        out2_b = jnp.dot(pt[:, b * C:(b + 1) * C].astype(bf16), w2,
                         preferred_element_type=f32) + b2       # (T, D)
        out_ref[b * T:(b + 1) * T, :] = _layernorm(
            out2_b + resid[b * T:(b + 1) * T, :], ln1g, ln1b)   # ln_1; mask is None


def _pack_params(P, d_w, d_g, d_b, p_w, p_g, p_b):
    """Pack all weights/biases + per-sample SC conv weights into one (112,128) bf16 slab."""
    wqkv = jnp.concatenate([P['wq'], P['wk'], P['wv']], axis=1)      # (D, 3*NH*DK)
    bqkv = jnp.concatenate([P['bq'], P['bk'], P['bv']], axis=1)      # (1, 3*NH*DK)

    # F.normalize(d_w, dim=1) over in_ch, * d_g; fold in the literal x T factor produced
    # by d_w.expand(-1,-1,T,-1) + einsum('bctk,bcwk->bct') (the 'w' axis gets summed).
    dnorm = jnp.sqrt(jnp.sum(d_w * d_w, axis=1, keepdims=True))
    dwn = d_w / jnp.maximum(dnorm, NORM_EPS) * d_g[:, :, None, None]     # (B, C, 1, K)
    dwn = jnp.transpose(dwn[:, :, 0, :], (0, 2, 1)) * jnp.float32(T)     # (B, K, C)
    dw_rows = jnp.concatenate([dwn[b] for b in range(B)], axis=1)        # (K, B*C)

    # F.normalize(p_w, dim=1) over out_ch, * p_g; build block-diagonal (B*C, B*C)
    pw = p_w[..., 0]                                                     # (B, Cout, Cin)
    pnorm = jnp.sqrt(jnp.sum(pw * pw, axis=1, keepdims=True))
    pwn = pw / jnp.maximum(pnorm, NORM_EPS) * p_g[:, :, None]            # (B, Cout, Cin)
    pw_blk = jnp.zeros((B * C, B * C), jnp.float32)
    for b in range(B):
        pw_blk = pw_blk.at[b * C:(b + 1) * C, b * C:(b + 1) * C].set(pwn[b])

    slab = jnp.zeros((SLAB_ROWS, SLAB_LANES), jnp.float32)

    def put(s, row, col, a):
        return s.at[row:row + a.shape[0], col:col + a.shape[1]].set(a.astype(jnp.float32))

    slab = put(slab, R_WQKV, 0, wqkv)
    slab = put(slab, R_WO, 96, P['wo'])
    slab = put(slab, R_W1, 0, P['w1'])
    slab = put(slab, R_W2, 0, P['w2'])
    slab = put(slab, R_PWB, 0, pw_blk)
    slab = put(slab, R_DW, 0, dw_rows)
    slab = put(slab, R_VEC0, 0, bqkv)
    slab = put(slab, R_VEC0, 96, P['bo'])
    slab = put(slab, R_VEC1, 0, P['ln0g'])
    slab = put(slab, R_VEC1, 32, P['ln0b'])
    slab = put(slab, R_VEC1, 64, P['ln1g'])
    slab = put(slab, R_VEC1, 96, P['ln1b'])
    slab = put(slab, R_VEC2, 0, P['b1'])
    slab = put(slab, R_VEC2, 8, P['b2'])
    slab = put(slab, R_VEC2, 40, d_b.reshape(1, B * C))
    slab = put(slab, R_VEC2, 56, p_b.reshape(1, B * C))
    return slab.astype(jnp.bfloat16)


@jax.jit
def scfft_block(x, P, d_w, d_g, d_b, p_w, p_g, p_b):
    """x: (B, T, D) f32.  d_w: (B, C, 1, K), d_g/d_b: (B, C),
       p_w: (B, C, C, 1), p_g/p_b: (B, C)  -- PyTorch conventions."""
    slab = _pack_params(P, d_w, d_g, d_b, p_w, p_g, p_b)
    x2 = x.reshape(BT, D)                                       # batch fused into rows

    out, attn = pl.pallas_call(
        scfft_kernel,
        out_shape=(jax.ShapeDtypeStruct((BT, D), jnp.float32),
                   jax.ShapeDtypeStruct((B * NH * T, T), jnp.float32)),
        grid_spec=pltpu.PrefetchScalarGridSpec(
            num_scalar_prefetch=0,
            grid=(1,),                                          # single fused step
            in_specs=[pl.BlockSpec((BT, D), lambda i: (0, 0)),
                      pl.BlockSpec((SLAB_ROWS, SLAB_LANES), lambda i: (0, 0))],
            out_specs=(pl.BlockSpec((BT, D), lambda i: (0, 0)),
                       pl.BlockSpec((B * NH * T, T), lambda i: (0, 0)))),
        compiler_params=pltpu.CompilerParams(
            dimension_semantics=("arbitrary",)),
    )(x2, slab)
    return out.reshape(B, T, D), attn.reshape(B, NH, T, T)


# ---------------- pure-JAX f32 reference (literal transcription of the module) ----------------
def ref_forward(x, P, d_w, d_g, d_b, p_w, p_g, p_b):
    # MHA (assumed structure: per-head SDPA, output projection, residual; no internal LN)
    q = (x @ P['wq'] + P['bq']).reshape(B, T, NH, DK)
    k = (x @ P['wk'] + P['bk']).reshape(B, T, NH, DK)
    v = (x @ P['wv'] + P['bv']).reshape(B, T, NH, DV)
    s = jnp.einsum('bthd,bshd->bhts', q, k) / jnp.sqrt(jnp.float32(DK))
    attn = jax.nn.softmax(s, axis=-1)
    ctx = jnp.einsum('bhts,bshd->bthd', attn, v).reshape(B, T, NH * DV)
    mha = ctx @ P['wo'] + P['bo'] + x

    def ln(y, g, b_):
        mu = y.mean(-1, keepdims=True)
        var = ((y - mu) ** 2).mean(-1, keepdims=True)
        return (y - mu) / jnp.sqrt(var + LN_EPS) * g + b_

    resid = ln(mha, P['ln0g'], P['ln0b'])                        # ln_0 (mask is None)

    # SCPositionwiseFeedForward_low -- literal transcription of the PyTorch ops
    h = resid @ P['w1'] + P['b1']                                # w_1 (1x1 ConvNorm)
    h = h * jnp.tanh(jax.nn.softplus(h))                         # Mish
    out_c = jnp.transpose(h, (0, 2, 1))                          # (B, C, T)
    x_padded = jnp.pad(out_c, ((0, 0), (0, 0), (PAD, PAD)))
    x_unf = jnp.stack([x_padded[:, :, kk:kk + T] for kk in range(K)], axis=-1)  # unfold

    dwn = d_w / jnp.maximum(jnp.sqrt(jnp.sum(d_w ** 2, axis=1, keepdims=True)),
                            NORM_EPS) * d_g[:, :, None, None]
    pwn = p_w / jnp.maximum(jnp.sqrt(jnp.sum(p_w ** 2, axis=1, keepdims=True)),
                            NORM_EPS) * p_g[:, :, None, None]

    # literal: d_w.expand(-1,-1,T,-1), then einsum('bctk,bcwk->bct') sums the size-T 'w'
    # axis, i.e. multiplies the depthwise conv output by T.
    dwn_exp = jnp.broadcast_to(dwn, (B, C, T, K))
    xc = jnp.einsum('bctk,bcwk->bct', x_unf, dwn_exp) + d_b[:, :, None]
    xc = jnp.einsum('bct,bco->bot', xc, pwn[..., 0]) + p_b[:, :, None]

    out2 = jnp.transpose(xc, (0, 2, 1)) @ P['w2'] + P['b2']      # w_2 (1x1 ConvNorm)
    y = ln(out2 + resid, P['ln1g'], P['ln1b'])                   # ln_1 (mask is None)
    return y, attn


if __name__ == "__main__":
    key = jax.random.PRNGKey(0)
    ks = jax.random.split(key, 24)

    def rnd(k, shape, scale=0.1):
        return (jax.random.normal(k, shape, jnp.float32) * scale).astype(jnp.float32)

    # deterministic synthetic parameters (shapes per module __init__)
    P = dict(
        wq=rnd(ks[0], (D, NH * DK)), bq=rnd(ks[1], (1, NH * DK)),
        wk=rnd(ks[2], (D, NH * DK)), bk=rnd(ks[3], (1, NH * DK)),
        wv=rnd(ks[4], (D, NH * DV)), bv=rnd(ks[5], (1, NH * DV)),
        wo=rnd(ks[6], (NH * DV, D)), bo=rnd(ks[7], (1, D)),
        ln0g=jnp.ones((1, D), jnp.float32), ln0b=jnp.zeros((1, D), jnp.float32),
        w1=rnd(ks[8], (D, C)), b1=rnd(ks[9], (1, C)),
        w2=rnd(ks[10], (C, D)), b2=rnd(ks[11], (1, D)),
        ln1g=jnp.ones((1, D), jnp.float32), ln1b=jnp.zeros((1, D), jnp.float32),
    )

    x = rnd(ks[12], (B, T, D), scale=1.0)
    d_w = rnd(ks[13], (B, C, 1, K), scale=1.0)
    d_g = rnd(ks[14], (B, C), scale=1.0)
    d_b = rnd(ks[15], (B, C), scale=1.0)
    p_w = rnd(ks[16], (B, C, C, 1), scale=1.0)
    p_g = rnd(ks[17], (B, C), scale=1.0)
    p_b = rnd(ks[18], (B, C), scale=1.0)

    out, attn = scfft_block(x, P, d_w, d_g, d_b, p_w, p_g, p_b)
    out = jax.block_until_ready(out)
    attn = jax.block_until_ready(attn)

    out_ref, attn_ref = ref_forward(x, P, d_w, d_g, d_b, p_w, p_g, p_b)
    assert out.shape == (B, T, D) and attn.shape == (B, NH, T, T)
    # tolerance loosened slightly vs the f32 version: weights are stored / matmuls run
    # in bf16 (f32 accumulation), and the softmax uses the EUP approx reciprocal.
    assert jnp.allclose(out, out_ref, atol=4e-2, rtol=4e-2), \
        f"max diff {jnp.max(jnp.abs(out - out_ref))}"
    assert jnp.allclose(attn, attn_ref, atol=4e-2, rtol=4e-2), \
        f"max diff {jnp.max(jnp.abs(attn - attn_ref))}"

    print("KERNEL_OK")
</pallas_src>

<mosaic_0001>
module attributes {stable_mosaic.version = 11 : i64} {
  func.func @scfft_kernel(%arg0: i32, %arg1: memref<32x32xf32, #tpu.memory_space<vmem>>, %arg2: memref<112x128xbf16, #tpu.memory_space<vmem>>, %arg3: memref<32x32xf32, #tpu.memory_space<vmem>>, %arg4: memref<64x16xf32, #tpu.memory_space<vmem>>) attributes {dimension_semantics = [#tpu.dimension_semantics<arbitrary>], iteration_bounds = array<i64: 1>, scalar_prefetch = 0 : i64, scratch_operands = 0 : i64, tpu.core_type = #tpu.core_type<tc>, window_params = [{pipeline_mode = #tpu.pipeline_mode<synchronous>, transform_indices = @transform_0, window_bounds = array<i64: 32, 32>}, {pipeline_mode = #tpu.pipeline_mode<synchronous>, transform_indices = @transform_1, window_bounds = array<i64: 112, 128>}, {pipeline_mode = #tpu.pipeline_mode<synchronous>, transform_indices = @transform_2, window_bounds = array<i64: 32, 32>}, {pipeline_mode = #tpu.pipeline_mode<synchronous>, transform_indices = @transform_3, window_bounds = array<i64: 64, 16>}]} {
    %c0 = arith.constant 0 : index
    %c0_0 = arith.constant 0 : index
    %0 = vector.load %arg1[%c0, %c0_0] : memref<32x32xf32, #tpu.memory_space<vmem>>, vector<32x32xf32>
    %c0_1 = arith.constant 0 : index
    %c0_2 = arith.constant 0 : index
    %1 = vector.load %arg2[%c0_1, %c0_2] : memref<112x128xbf16, #tpu.memory_space<vmem>>, vector<32x96xbf16>
    %c105 = arith.constant 105 : index
    %c0_3 = arith.constant 0 : index
    %2 = vector.load %arg2[%c105, %c0_3] : memref<112x128xbf16, #tpu.memory_space<vmem>>, vector<1x96xbf16>
    %3 = arith.extf %2 : vector<1x96xbf16> to vector<1x96xf32>
    %4 = arith.truncf %0 : vector<32x32xf32> to vector<32x32xbf16>
    %cst = arith.constant dense<0.000000e+00> : vector<32x96xf32>
    %5 = tpu.matmul %4, %1, %cst {dimension_numbers = #tpu.dot_dimension_numbers<[1], [0], [0], [1], [0, 0, 1, 1], [], []>} : vector<32x32xbf16>, vector<32x96xbf16>, vector<32x96xf32> -> vector<32x96xf32>
    %6 = vector.broadcast %3 : vector<1x96xf32> to vector<32x96xf32>
    %7 = arith.addf %5, %6 : vector<32x96xf32>
    %8 = arith.truncf %7 : vector<32x96xf32> to vector<32x96xbf16>
    %c0_4 = arith.constant 0 : index
    %c96 = arith.constant 96 : index
    %9 = vector.load %arg2[%c0_4, %c96] : memref<112x128xbf16, #tpu.memory_space<vmem>>, vector<32x32xbf16>
    %c105_5 = arith.constant 105 : index
    %c96_6 = arith.constant 96 : index
    %10 = vector.load %arg2[%c105_5, %c96_6] : memref<112x128xbf16, #tpu.memory_space<vmem>>, vector<1x32xbf16>
    %11 = arith.extf %10 : vector<1x32xbf16> to vector<1x32xf32>
    %cst_7 = arith.constant 1.600000e+01 : f32
    %12 = math.sqrt %cst_7 : f32
    %cst_8 = arith.constant 1.000000e+00 : f32
    %13 = arith.divf %cst_8, %12 : f32
    %14 = vector.extract_strided_slice %0 {offsets = [0, 0], sizes = [16, 32], strides = [1, 1]} : vector<32x32xf32> to vector<16x32xf32>
    %15 = vector.broadcast %11 : vector<1x32xf32> to vector<16x32xf32>
    %16 = arith.addf %14, %15 : vector<16x32xf32>
    %17 = vector.extract_strided_slice %8 {offsets = [0, 0], sizes = [16, 16], strides = [1, 1]} : vector<32x96xbf16> to vector<16x16xbf16>
    %18 = vector.extract_strided_slice %8 {offsets = [0, 32], sizes = [16, 16], strides = [1, 1]} : vector<32x96xbf16> to vector<16x16xbf16>
    %19 = vector.extract_strided_slice %8 {offsets = [0, 64], sizes = [16, 16], strides = [1, 1]} : vector<32x96xbf16> to vector<16x16xbf16>
    %20 = tpu.transpose %18, [1, 0] : vector<16x16xbf16> -> vector<16x16xbf16>
    %cst_9 = arith.constant dense<0.000000e+00> : vector<16x16xf32>
    %21 = tpu.matmul %17, %20, %cst_9 {dimension_numbers = #tpu.dot_dimension_numbers<[1], [0], [0], [1], [0, 0, 1, 1], [], []>} : vector<16x16xbf16>, vector<16x16xbf16>, vector<16x16xf32> -> vector<16x16xf32>
    %22 = vector.broadcast %13 : f32 to vector<16x16xf32>
    %23 = arith.mulf %21, %22 : vector<16x16xf32>
    %cst_10 = arith.constant dense<0xFF800000> : vector<16xf32>
    %24 = vector.multi_reduction <maximumf>, %23, %cst_10 [1] : vector<16x16xf32> to vector<16xf32>
    %25 = vector.shape_cast %24 : vector<16xf32> to vector<16x1xf32>
    %26 = vector.broadcast %25 : vector<16x1xf32> to vector<16x16xf32>
    %27 = arith.subf %23, %26 : vector<16x16xf32>
    %28 = math.exp %27 : vector<16x16xf32>
    %cst_11 = arith.constant dense<0.000000e+00> : vector<16xf32>
    %29 = vector.multi_reduction <add>, %28, %cst_11 [1] : vector<16x16xf32> to vector<16xf32>
    %30 = vector.shape_cast %29 : vector<16xf32> to vector<16x1xf32>
    %31 = tpu.reciprocal %30 {approx = true} : vector<16x1xf32> -> vector<16x1xf32>
    %32 = vector.broadcast %31 : vector<16x1xf32> to vector<16x16xf32>
    %33 = arith.mulf %28, %32 : vector<16x16xf32>
    %c0_12 = arith.constant 0 : index
    %c0_13 = arith.constant 0 : index
    %34 = vector.load %arg4[%c0_12, %c0_13] : memref<64x16xf32, #tpu.memory_space<vmem>>, vector<16x16xf32>
    tpu.vector_store %arg4[%c0_12, %c0_13], %33 {strides = array<i32>} : memref<64x16xf32, #tpu.memory_space<vmem>>, vector<16x16xf32>,
    %35 = arith.truncf %33 : vector<16x16xf32> to vector<16x16xbf16>
    %cst_14 = arith.constant dense<0.000000e+00> : vector<16x16xf32>
    %36 = tpu.matmul %35, %19, %cst_14 {dimension_numbers = #tpu.dot_dimension_numbers<[1], [0], [0], [1], [0, 0, 1, 1], [], []>} : vector<16x16xbf16>, vector<16x16xbf16>, vector<16x16xf32> -> vector<16x16xf32>
    %37 = arith.truncf %36 : vector<16x16xf32> to vector<16x16xbf16>
    %38 = vector.extract_strided_slice %9 {offsets = [0, 0], sizes = [16, 32], strides = [1, 1]} : vector<32x32xbf16> to vector<16x32xbf16>
    %cst_15 = arith.constant dense<0.000000e+00> : vector<16x32xf32>
    %39 = tpu.matmul %37, %38, %cst_15 {dimension_numbers = #tpu.dot_dimension_numbers<[1], [0], [0], [1], [0, 0, 1, 1], [], []>} : vector<16x16xbf16>, vector<16x32xbf16>, vector<16x32xf32> -> vector<16x32xf32>
    %40 = arith.addf %16, %39 : vector<16x32xf32>
    %41 = vector.extract_strided_slice %8 {offsets = [0, 16], sizes = [16, 16], strides = [1, 1]} : vector<32x96xbf16> to vector<16x16xbf16>
    %42 = vector.extract_strided_slice %8 {offsets = [0, 48], sizes = [16, 16], strides = [1, 1]} : vector<32x96xbf16> to vector<16x16xbf16>
    %43 = vector.extract_strided_slice %8 {offsets = [0, 80], sizes = [16, 16], strides = [1, 1]} : vector<32x96xbf16> to vector<16x16xbf16>
    %44 = tpu.transpose %42, [1, 0] : vector<16x16xbf16> -> vector<16x16xbf16>
    %cst_16 = arith.constant dense<0.000000e+00> : vector<16x16xf32>
    %45 = tpu.matmul %41, %44, %cst_16 {dimension_numbers = #tpu.dot_dimension_numbers<[1], [0], [0], [1], [0, 0, 1, 1], [], []>} : vector<16x16xbf16>, vector<16x16xbf16>, vector<16x16xf32> -> vector<16x16xf32>
    %46 = vector.broadcast %13 : f32 to vector<16x16xf32>
    %47 = arith.mulf %45, %46 : vector<16x16xf32>
    %cst_17 = arith.constant dense<0xFF800000> : vector<16xf32>
    %48 = vector.multi_reduction <maximumf>, %47, %cst_17 [1] : vector<16x16xf32> to vector<16xf32>
    %49 = vector.shape_cast %48 : vector<16xf32> to vector<16x1xf32>
    %50 = vector.broadcast %49 : vector<16x1xf32> to vector<16x16xf32>
    %51 = arith.subf %47, %50 : vector<16x16xf32>
    %52 = math.exp %51 : vector<16x16xf32>
    %cst_18 = arith.constant dense<0.000000e+00> : vector<16xf32>
    %53 = vector.multi_reduction <add>, %52, %cst_18 [1] : vector<16x16xf32> to vector<16xf32>
    %54 = vector.shape_cast %53 : vector<16xf32> to vector<16x1xf32>
    %55 = tpu.reciprocal %54 {approx = true} : vector<16x1xf32> -> vector<16x1xf32>
    %56 = vector.broadcast %55 : vector<16x1xf32> to vector<16x16xf32>
    %57 = arith.mulf %52, %56 : vector<16x16xf32>
    %c16 = arith.constant 16 : index
    %c0_19 = arith.constant 0 : index
    %58 = vector.load %arg4[%c16, %c0_19] : memref<64x16xf32, #tpu.memory_space<vmem>>, vector<16x16xf32>
    tpu.vector_store %arg4[%c16, %c0_19], %57 {strides = array<i32>} : memref<64x16xf32, #tpu.memory_space<vmem>>, vector<16x16xf32>,
    %59 = arith.truncf %57 : vector<16x16xf32> to vector<16x16xbf16>
    %cst_20 = arith.constant dense<0.000000e+00> : vector<16x16xf32>
    %60 = tpu.matmul %59, %43, %cst_20 {dimension_numbers = #tpu.dot_dimension_numbers<[1], [0], [0], [1], [0, 0, 1, 1], [], []>} : vector<16x16xbf16>, vector<16x16xbf16>, vector<16x16xf32> -> vector<16x16xf32>
    %61 = arith.truncf %60 : vector<16x16xf32> to vector<16x16xbf16>
    %62 = vector.extract_strided_slice %9 {offsets = [16, 0], sizes = [16, 32], strides = [1, 1]} : vector<32x32xbf16> to vector<16x32xbf16>
    %cst_21 = arith.constant dense<0.000000e+00> : vector<16x32xf32>
    %63 = tpu.matmul %61, %62, %cst_21 {dimension_numbers = #tpu.dot_dimension_numbers<[1], [0], [0], [1], [0, 0, 1, 1], [], []>} : vector<16x16xbf16>, vector<16x32xbf16>, vector<16x32xf32> -> vector<16x32xf32>
    %64 = arith.addf %40, %63 : vector<16x32xf32>
    %65 = vector.extract_strided_slice %0 {offsets = [16, 0], sizes = [16, 32], strides = [1, 1]} : vector<32x32xf32> to vector<16x32xf32>
    %66 = vector.broadcast %11 : vector<1x32xf32> to vector<16x32xf32>
    %67 = arith.addf %65, %66 : vector<16x32xf32>
    %68 = vector.extract_strided_slice %8 {offsets = [16, 0], sizes = [16, 16], strides = [1, 1]} : vector<32x96xbf16> to vector<16x16xbf16>
    %69 = vector.extract_strided_slice %8 {offsets = [16, 32], sizes = [16, 16], strides = [1, 1]} : vector<32x96xbf16> to vector<16x16xbf16>
    %70 = vector.extract_strided_slice %8 {offsets = [16, 64], sizes = [16, 16], strides = [1, 1]} : vector<32x96xbf16> to vector<16x16xbf16>
    %71 = tpu.transpose %69, [1, 0] : vector<16x16xbf16> -> vector<16x16xbf16>
    %cst_22 = arith.constant dense<0.000000e+00> : vector<16x16xf32>
    %72 = tpu.matmul %68, %71, %cst_22 {dimension_numbers = #tpu.dot_dimension_numbers<[1], [0], [0], [1], [0, 0, 1, 1], [], []>} : vector<16x16xbf16>, vector<16x16xbf16>, vector<16x16xf32> -> vector<16x16xf32>
    %73 = vector.broadcast %13 : f32 to vector<16x16xf32>
    %74 = arith.mulf %72, %73 : vector<16x16xf32>
    %cst_23 = arith.constant dense<0xFF800000> : vector<16xf32>
    %75 = vector.multi_reduction <maximumf>, %74, %cst_23 [1] : vector<16x16xf32> to vector<16xf32>
    %76 = vector.shape_cast %75 : vector<16xf32> to vector<16x1xf32>
    %77 = vector.broadcast %76 : vector<16x1xf32> to vector<16x16xf32>
    %78 = arith.subf %74, %77 : vector<16x16xf32>
    %79 = math.exp %78 : vector<16x16xf32>
    %cst_24 = arith.constant dense<0.000000e+00> : vector<16xf32>
    %80 = vector.multi_reduction <add>, %79, %cst_24 [1] : vector<16x16xf32> to vector<16xf32>
    %81 = vector.shape_cast %80 : vector<16xf32> to vector<16x1xf32>
    %82 = tpu.reciprocal %81 {approx = true} : vector<16x1xf32> -> vector<16x1xf32>
    %83 = vector.broadcast %82 : vector<16x1xf32> to vector<16x16xf32>
    %84 = arith.mulf %79, %83 : vector<16x16xf32>
    %c32 = arith.constant 32 : index
    %c0_25 = arith.constant 0 : index
    %85 = vector.load %arg4[%c32, %c0_25] : memref<64x16xf32, #tpu.memory_space<vmem>>, vector<16x16xf32>
    tpu.vector_store %arg4[%c32, %c0_25], %84 {strides = array<i32>} : memref<64x16xf32, #tpu.memory_space<vmem>>, vector<16x16xf32>,
    %86 = arith.truncf %84 : vector<16x16xf32> to vector<16x16xbf16>
    %cst_26 = arith.constant dense<0.000000e+00> : vector<16x16xf32>
    %87 = tpu.matmul %86, %70, %cst_26 {dimension_numbers = #tpu.dot_dimension_numbers<[1], [0], [0], [1], [0, 0, 1, 1], [], []>} : vector<16x16xbf16>, vector<16x16xbf16>, vector<16x16xf32> -> vector<16x16xf32>
    %88 = arith.truncf %87 : vector<16x16xf32> to vector<16x16xbf16>
    %89 = vector.extract_strided_slice %9 {offsets = [0, 0], sizes = [16, 32], strides = [1, 1]} : vector<32x32xbf16> to vector<16x32xbf16>
    %cst_27 = arith.constant dense<0.000000e+00> : vector<16x32xf32>
    %90 = tpu.matmul %88, %89, %cst_27 {dimension_numbers = #tpu.dot_dimension_numbers<[1], [0], [0], [1], [0, 0, 1, 1], [], []>} : vector<16x16xbf16>, vector<16x32xbf16>, vector<16x32xf32> -> vector<16x32xf32>
    %91 = arith.addf %67, %90 : vector<16x32xf32>
    %92 = vector.extract_strided_slice %8 {offsets = [16, 16], sizes = [16, 16], strides = [1, 1]} : vector<32x96xbf16> to vector<16x16xbf16>
    %93 = vector.extract_strided_slice %8 {offsets = [16, 48], sizes = [16, 16], strides = [1, 1]} : vector<32x96xbf16> to vector<16x16xbf16>
    %94 = vector.extract_strided_slice %8 {offsets = [16, 80], sizes = [16, 16], strides = [1, 1]} : vector<32x96xbf16> to vector<16x16xbf16>
    %95 = tpu.transpose %93, [1, 0] : vector<16x16xbf16> -> vector<16x16xbf16>
    %cst_28 = arith.constant dense<0.000000e+00> : vector<16x16xf32>
    %96 = tpu.matmul %92, %95, %cst_28 {dimension_numbers = #tpu.dot_dimension_numbers<[1], [0], [0], [1], [0, 0, 1, 1], [], []>} : vector<16x16xbf16>, vector<16x16xbf16>, vector<16x16xf32> -> vector<16x16xf32>
    %97 = vector.broadcast %13 : f32 to vector<16x16xf32>
    %98 = arith.mulf %96, %97 : vector<16x16xf32>
    %cst_29 = arith.constant dense<0xFF800000> : vector<16xf32>
    %99 = vector.multi_reduction <maximumf>, %98, %cst_29 [1] : vector<16x16xf32> to vector<16xf32>
    %100 = vector.shape_cast %99 : vector<16xf32> to vector<16x1xf32>
    %101 = vector.broadcast %100 : vector<16x1xf32> to vector<16x16xf32>
    %102 = arith.subf %98, %101 : vector<16x16xf32>
    %103 = math.exp %102 : vector<16x16xf32>
    %cst_30 = arith.constant dense<0.000000e+00> : vector<16xf32>
    %104 = vector.multi_reduction <add>, %103, %cst_30 [1] : vector<16x16xf32> to vector<16xf32>
    %105 = vector.shape_cast %104 : vector<16xf32> to vector<16x1xf32>
    %106 = tpu.reciprocal %105 {approx = true} : vector<16x1xf32> -> vector<16x1xf32>
    %107 = vector.broadcast %106 : vector<16x1xf32> to vector<16x16xf32>
    %108 = arith.mulf %103, %107 : vector<16x16xf32>
    %c48 = arith.constant 48 : index
    %c0_31 = arith.constant 0 : index
    %109 = vector.load %arg4[%c48, %c0_31] : memref<64x16xf32, #tpu.memory_space<vmem>>, vector<16x16xf32>
    tpu.vector_store %arg4[%c48, %c0_31], %108 {strides = array<i32>} : memref<64x16xf32, #tpu.memory_space<vmem>>, vector<16x16xf32>,
    %110 = arith.truncf %108 : vector<16x16xf32> to vector<16x16xbf16>
    %cst_32 = arith.constant dense<0.000000e+00> : vector<16x16xf32>
    %111 = tpu.matmul %110, %94, %cst_32 {dimension_numbers = #tpu.dot_dimension_numbers<[1], [0], [0], [1], [0, 0, 1, 1], [], []>} : vector<16x16xbf16>, vector<16x16xbf16>, vector<16x16xf32> -> vector<16x16xf32>
    %112 = arith.truncf %111 : vector<16x16xf32> to vector<16x16xbf16>
    %113 = vector.extract_strided_slice %9 {offsets = [16, 0], sizes = [16, 32], strides = [1, 1]} : vector<32x32xbf16> to vector<16x32xbf16>
    %cst_33 = arith.constant dense<0.000000e+00> : vector<16x32xf32>
    %114 = tpu.matmul %112, %113, %cst_33 {dimension_numbers = #tpu.dot_dimension_numbers<[1], [0], [0], [1], [0, 0, 1, 1], [], []>} : vector<16x16xbf16>, vector<16x32xbf16>, vector<16x32xf32> -> vector<16x32xf32>
    %115 = arith.addf %91, %114 : vector<16x32xf32>
    %116 = tpu.concatenate %64, %115 in 0 : vector<16x32xf32>, vector<16x32xf32> -> vector<32x32xf32>
    %c106 = arith.constant 106 : index
    %c0_34 = arith.constant 0 : index
    %117 = vector.load %arg2[%c106, %c0_34] : memref<112x128xbf16, #tpu.memory_space<vmem>>, vector<1x32xbf16>
    %118 = arith.extf %117 : vector<1x32xbf16> to vector<1x32xf32>
    %c106_35 = arith.constant 106 : index
    %c32_36 = arith.constant 32 : index
    %119 = vector.load %arg2[%c106_35, %c32_36] : memref<112x128xbf16, #tpu.memory_space<vmem>>, vector<1x32xbf16>
    %120 = arith.extf %119 : vector<1x32xbf16> to vector<1x32xf32>
    %cst_37 = arith.constant dense<0.000000e+00> : vector<32xf32>
    %121 = vector.multi_reduction <add>, %116, %cst_37 [1] : vector<32x32xf32> to vector<32xf32>
    %122 = vector.shape_cast %121 : vector<32xf32> to vector<32x1xf32>
    %cst_38 = arith.constant 3.200000e+01 : f32
    %123 = vector.broadcast %cst_38 : f32 to vector<32x1xf32>
    %124 = arith.divf %122, %123 : vector<32x1xf32>
    %125 = vector.broadcast %124 : vector<32x1xf32> to vector<32x32xf32>
    %126 = arith.subf %116, %125 : vector<32x32xf32>
    %127 = arith.mulf %126, %126 : vector<32x32xf32>
    %cst_39 = arith.constant dense<0.000000e+00> : vector<32xf32>
    %128 = vector.multi_reduction <add>, %127, %cst_39 [1] : vector<32x32xf32> to vector<32xf32>
    %129 = vector.shape_cast %128 : vector<32xf32> to vector<32x1xf32>
    %cst_40 = arith.constant 3.200000e+01 : f32
    %130 = vector.broadcast %cst_40 : f32 to vector<32x1xf32>
    %131 = arith.divf %129, %130 : vector<32x1xf32>
    %132 = vector.broadcast %124 : vector<32x1xf32> to vector<32x32xf32>
    %133 = arith.subf %116, %132 : vector<32x32xf32>
    %cst_41 = arith.constant 9.99999974E-6 : f32
    %134 = vector.broadcast %cst_41 : f32 to vector<32x1xf32>
    %135 = arith.addf %131, %134 : vector<32x1xf32>
    %136 = math.rsqrt %135 : vector<32x1xf32>
    %137 = vector.broadcast %136 : vector<32x1xf32> to vector<32x32xf32>
    %138 = arith.mulf %133, %137 : vector<32x32xf32>
    %139 = vector.broadcast %118 : vector<1x32xf32> to vector<32x32xf32>
    %140 = arith.mulf %138, %139 : vector<32x32xf32>
    %141 = vector.broadcast %120 : vector<1x32xf32> to vector<32x32xf32>
    %142 = arith.addf %140, %141 : vector<32x32xf32>
    %c32_42 = arith.constant 32 : index
    %c0_43 = arith.constant 0 : index
    %143 = vector.load %arg2[%c32_42, %c0_43] : memref<112x128xbf16, #tpu.memory_space<vmem>>, vector<32x8xbf16>
    %c107 = arith.constant 107 : index
    %c0_44 = arith.constant 0 : index
    %144 = vector.load %arg2[%c107, %c0_44] : memref<112x128xbf16, #tpu.memory_space<vmem>>, vector<1x8xbf16>
    %145 = arith.extf %144 : vector<1x8xbf16> to vector<1x8xf32>
    %146 = arith.truncf %142 : vector<32x32xf32> to vector<32x32xbf16>
    %cst_45 = arith.constant dense<0.000000e+00> : vector<32x8xf32>
    %147 = tpu.matmul %146, %143, %cst_45 {dimension_numbers = #tpu.dot_dimension_numbers<[1], [0], [0], [1], [0, 0, 1, 1], [], []>} : vector<32x32xbf16>, vector<32x8xbf16>, vector<32x8xf32> -> vector<32x8xf32>
    %148 = vector.broadcast %145 : vector<1x8xf32> to vector<32x8xf32>
    %149 = arith.addf %147, %148 : vector<32x8xf32>
    %cst_46 = arith.constant 0.000000e+00 : f32
    %150 = vector.broadcast %cst_46 : f32 to vector<32x8xf32>
    %151 = arith.maximumf %149, %150 : vector<32x8xf32>
    %152 = vector.broadcast %cst_46 : f32 to vector<32x8xf32>
    %153 = arith.subf %149, %152 : vector<32x8xf32>
    %154 = arith.cmpf one, %153, %153 : vector<32x8xf32>
    %155 = vector.broadcast %cst_46 : f32 to vector<32x8xf32>
    %156 = arith.addf %149, %155 : vector<32x8xf32>
    %157 = math.absf %153 : vector<32x8xf32>
    %cst_47 = arith.constant 0.000000e+00 : f32
    %158 = vector.broadcast %cst_47 : f32 to vector<32x8xf32>
    %159 = arith.subf %158, %157 : vector<32x8xf32>
    %160 = math.exp %159 : vector<32x8xf32>
    %161 = math.log1p %160 : vector<32x8xf32>
    %162 = arith.addf %151, %161 : vector<32x8xf32>
    %163 = arith.select %154, %156, %162 : vector<32x8xi1>, vector<32x8xf32>
    %164 = math.tanh %163 : vector<32x8xf32>
    %165 = arith.mulf %149, %164 : vector<32x8xf32>
    %166 = vector.extract_strided_slice %165 {offsets = [0, 0], sizes = [16, 8], strides = [1, 1]} : vector<32x8xf32> to vector<16x8xf32>
    %167 = vector.extract_strided_slice %165 {offsets = [16, 0], sizes = [16, 8], strides = [1, 1]} : vector<32x8xf32> to vector<16x8xf32>
    %168 = tpu.concatenate %166, %167 in 1 : vector<16x8xf32>, vector<16x8xf32> -> vector<16x16xf32>
    %c96_48 = arith.constant 96 : index
    %c0_49 = arith.constant 0 : index
    %169 = vector.load %arg2[%c96_48, %c0_49] : memref<112x128xbf16, #tpu.memory_space<vmem>>, vector<9x16xbf16>
    %170 = arith.extf %169 : vector<9x16xbf16> to vector<9x16xf32>
    %c107_50 = arith.constant 107 : index
    %c40 = arith.constant 40 : index
    %171 = vector.load %arg2[%c107_50, %c40] : memref<112x128xbf16, #tpu.memory_space<vmem>>, vector<1x16xbf16>
    %172 = arith.extf %171 : vector<1x16xbf16> to vector<1x16xf32>
    %173 = tpu.iota {dimensions = array<i32: 0>} : vector<16x16xi32>
    %174 = vector.shape_cast %172 : vector<1x16xf32> to vector<1x16xf32>
    %175 = vector.broadcast %174 : vector<1x16xf32> to vector<16x16xf32>
    %c4_i32 = arith.constant 4 : i32
    %176 = tpu.dynamic_rotate %168 by %c4_i32 dim 0 : vector<16x16xf32>, i32 -> vector<16x16xf32>
    %c4_i32_51 = arith.constant 4 : i32
    %177 = vector.broadcast %c4_i32_51 : i32 to vector<16x16xi32>
    %178 = arith.cmpi sge, %173, %177 : vector<16x16xi32>
    %cst_52 = arith.constant 0.000000e+00 : f32
    %179 = vector.broadcast %cst_52 : f32 to vector<16x16xf32>
    %180 = arith.select %178, %176, %179 : vector<16x16xi1>, vector<16x16xf32>
    %181 = vector.extract_strided_slice %170 {offsets = [0, 0], sizes = [1, 16], strides = [1, 1]} : vector<9x16xf32> to vector<1x16xf32>
    %182 = vector.broadcast %181 : vector<1x16xf32> to vector<16x16xf32>
    %183 = arith.mulf %180, %182 : vector<16x16xf32>
    %184 = arith.addf %175, %183 : vector<16x16xf32>
    %c3_i32 = arith.constant 3 : i32
    %185 = tpu.dynamic_rotate %168 by %c3_i32 dim 0 : vector<16x16xf32>, i32 -> vector<16x16xf32>
    %c3_i32_53 = arith.constant 3 : i32
    %186 = vector.broadcast %c3_i32_53 : i32 to vector<16x16xi32>
    %187 = arith.cmpi sge, %173, %186 : vector<16x16xi32>
    %cst_54 = arith.constant 0.000000e+00 : f32
    %188 = vector.broadcast %cst_54 : f32 to vector<16x16xf32>
    %189 = arith.select %187, %185, %188 : vector<16x16xi1>, vector<16x16xf32>
    %190 = vector.extract_strided_slice %170 {offsets = [1, 0], sizes = [1, 16], strides = [1, 1]} : vector<9x16xf32> to vector<1x16xf32>
    %191 = vector.broadcast %190 : vector<1x16xf32> to vector<16x16xf32>
    %192 = arith.mulf %189, %191 : vector<16x16xf32>
    %193 = arith.addf %184, %192 : vector<16x16xf32>
    %c2_i32 = arith.constant 2 : i32
    %194 = tpu.dynamic_rotate %168 by %c2_i32 dim 0 : vector<16x16xf32>, i32 -> vector<16x16xf32>
    %c2_i32_55 = arith.constant 2 : i32
    %195 = vector.broadcast %c2_i32_55 : i32 to vector<16x16xi32>
    %196 = arith.cmpi sge, %173, %195 : vector<16x16xi32>
    %cst_56 = arith.constant 0.000000e+00 : f32
    %197 = vector.broadcast %cst_56 : f32 to vector<16x16xf32>
    %198 = arith.select %196, %194, %197 : vector<16x16xi1>, vector<16x16xf32>
    %199 = vector.extract_strided_slice %170 {offsets = [2, 0], sizes = [1, 16], strides = [1, 1]} : vector<9x16xf32> to vector<1x16xf32>
    %200 = vector.broadcast %199 : vector<1x16xf32> to vector<16x16xf32>
    %201 = arith.mulf %198, %200 : vector<16x16xf32>
    %202 = arith.addf %193, %201 : vector<16x16xf32>
    %c1_i32 = arith.constant 1 : i32
    %203 = tpu.dynamic_rotate %168 by %c1_i32 dim 0 : vector<16x16xf32>, i32 -> vector<16x16xf32>
    %c1_i32_57 = arith.constant 1 : i32
    %204 = vector.broadcast %c1_i32_57 : i32 to vector<16x16xi32>
    %205 = arith.cmpi sge, %173, %204 : vector<16x16xi32>
    %cst_58 = arith.constant 0.000000e+00 : f32
    %206 = vector.broadcast %cst_58 : f32 to vector<16x16xf32>
    %207 = arith.select %205, %203, %206 : vector<16x16xi1>, vector<16x16xf32>
    %208 = vector.extract_strided_slice %170 {offsets = [3, 0], sizes = [1, 16], strides = [1, 1]} : vector<9x16xf32> to vector<1x16xf32>
    %209 = vector.broadcast %208 : vector<1x16xf32> to vector<16x16xf32>
    %210 = arith.mulf %207, %209 : vector<16x16xf32>
    %211 = arith.addf %202, %210 : vector<16x16xf32>
    %212 = vector.extract_strided_slice %170 {offsets = [4, 0], sizes = [1, 16], strides = [1, 1]} : vector<9x16xf32> to vector<1x16xf32>
    %213 = vector.broadcast %212 : vector<1x16xf32> to vector<16x16xf32>
    %214 = arith.mulf %168, %213 : vector<16x16xf32>
    %215 = arith.addf %211, %214 : vector<16x16xf32>
    %c15_i32 = arith.constant 15 : i32
    %216 = tpu.dynamic_rotate %168 by %c15_i32 dim 0 : vector<16x16xf32>, i32 -> vector<16x16xf32>
    %c15_i32_59 = arith.constant 15 : i32
    %217 = vector.broadcast %c15_i32_59 : i32 to vector<16x16xi32>
    %218 = arith.cmpi slt, %173, %217 : vector<16x16xi32>
    %cst_60 = arith.constant 0.000000e+00 : f32
    %219 = vector.broadcast %cst_60 : f32 to vector<16x16xf32>
    %220 = arith.select %218, %216, %219 : vector<16x16xi1>, vector<16x16xf32>
    %221 = vector.extract_strided_slice %170 {offsets = [5, 0], sizes = [1, 16], strides = [1, 1]} : vector<9x16xf32> to vector<1x16xf32>
    %222 = vector.broadcast %221 : vector<1x16xf32> to vector<16x16xf32>
    %223 = arith.mulf %220, %222 : vector<16x16xf32>
    %224 = arith.addf %215, %223 : vector<16x16xf32>
    %c14_i32 = arith.constant 14 : i32
    %225 = tpu.dynamic_rotate %168 by %c14_i32 dim 0 : vector<16x16xf32>, i32 -> vector<16x16xf32>
    %c14_i32_61 = arith.constant 14 : i32
    %226 = vector.broadcast %c14_i32_61 : i32 to vector<16x16xi32>
    %227 = arith.cmpi slt, %173, %226 : vector<16x16xi32>
    %cst_62 = arith.constant 0.000000e+00 : f32
    %228 = vector.broadcast %cst_62 : f32 to vector<16x16xf32>
    %229 = arith.select %227, %225, %228 : vector<16x16xi1>, vector<16x16xf32>
    %230 = vector.extract_strided_slice %170 {offsets = [6, 0], sizes = [1, 16], strides = [1, 1]} : vector<9x16xf32> to vector<1x16xf32>
    %231 = vector.broadcast %230 : vector<1x16xf32> to vector<16x16xf32>
    %232 = arith.mulf %229, %231 : vector<16x16xf32>
    %233 = arith.addf %224, %232 : vector<16x16xf32>
    %c13_i32 = arith.constant 13 : i32
    %234 = tpu.dynamic_rotate %168 by %c13_i32 dim 0 : vector<16x16xf32>, i32 -> vector<16x16xf32>
    %c13_i32_63 = arith.constant 13 : i32
    %235 = vector.broadcast %c13_i32_63 : i32 to vector<16x16xi32>
    %236 = arith.cmpi slt, %173, %235 : vector<16x16xi32>
    %cst_64 = arith.constant 0.000000e+00 : f32
    %237 = vector.broadcast %cst_64 : f32 to vector<16x16xf32>
    %238 = arith.select %236, %234, %237 : vector<16x16xi1>, vector<16x16xf32>
    %239 = vector.extract_strided_slice %170 {offsets = [7, 0], sizes = [1, 16], strides = [1, 1]} : vector<9x16xf32> to vector<1x16xf32>
    %240 = vector.broadcast %239 : vector<1x16xf32> to vector<16x16xf32>
    %241 = arith.mulf %238, %240 : vector<16x16xf32>
    %242 = arith.addf %233, %241 : vector<16x16xf32>
    %c12_i32 = arith.constant 12 : i32
    %243 = tpu.dynamic_rotate %168 by %c12_i32 dim 0 : vector<16x16xf32>, i32 -> vector<16x16xf32>
    %c12_i32_65 = arith.constant 12 : i32
    %244 = vector.broadcast %c12_i32_65 : i32 to vector<16x16xi32>
    %245 = arith.cmpi slt, %173, %244 : vector<16x16xi32>
    %cst_66 = arith.constant 0.000000e+00 : f32
    %246 = vector.broadcast %cst_66 : f32 to vector<16x16xf32>
    %247 = arith.select %245, %243, %246 : vector<16x16xi1>, vector<16x16xf32>
    %248 = vector.extract_strided_slice %170 {offsets = [8, 0], sizes = [1, 16], strides = [1, 1]} : vector<9x16xf32> to vector<1x16xf32>
    %249 = vector.broadcast %248 : vector<1x16xf32> to vector<16x16xf32>
    %250 = arith.mulf %247, %249 : vector<16x16xf32>
    %251 = arith.addf %242, %250 : vector<16x16xf32>
    %c80 = arith.constant 80 : index
    %c0_67 = arith.constant 0 : index
    %252 = vector.load %arg2[%c80, %c0_67] : memref<112x128xbf16, #tpu.memory_space<vmem>>, vector<16x16xbf16>
    %c107_68 = arith.constant 107 : index
    %c56 = arith.constant 56 : index
    %253 = vector.load %arg2[%c107_68, %c56] : memref<112x128xbf16, #tpu.memory_space<vmem>>, vector<1x16xbf16>
    %254 = arith.extf %253 : vector<1x16xbf16> to vector<1x16xf32>
    %255 = arith.truncf %251 : vector<16x16xf32> to vector<16x16xbf16>
    %cst_69 = arith.constant dense<0.000000e+00> : vector<16x16xf32>
    %256 = tpu.matmul %255, %252, %cst_69 {dimension_numbers = #tpu.dot_dimension_numbers<[1], [0], [0], [1], [0, 0, 1, 1], [], []>} : vector<16x16xbf16>, vector<16x16xbf16>, vector<16x16xf32> -> vector<16x16xf32>
    %257 = vector.broadcast %254 : vector<1x16xf32> to vector<16x16xf32>
    %258 = arith.addf %256, %257 : vector<16x16xf32>
    %c64 = arith.constant 64 : index
    %c0_70 = arith.constant 0 : index
    %259 = vector.load %arg2[%c64, %c0_70] : memref<112x128xbf16, #tpu.memory_space<vmem>>, vector<8x32xbf16>
    %c107_71 = arith.constant 107 : index
    %c8 = arith.constant 8 : index
    %260 = vector.load %arg2[%c107_71, %c8] : memref<112x128xbf16, #tpu.memory_space<vmem>>, vector<1x32xbf16>
    %261 = arith.extf %260 : vector<1x32xbf16> to vector<1x32xf32>
    %c106_72 = arith.constant 106 : index
    %c64_73 = arith.constant 64 : index
    %262 = vector.load %arg2[%c106_72, %c64_73] : memref<112x128xbf16, #tpu.memory_space<vmem>>, vector<1x32xbf16>
    %263 = arith.extf %262 : vector<1x32xbf16> to vector<1x32xf32>
    %c106_74 = arith.constant 106 : index
    %c96_75 = arith.constant 96 : index
    %264 = vector.load %arg2[%c106_74, %c96_75] : memref<112x128xbf16, #tpu.memory_space<vmem>>, vector<1x32xbf16>
    %265 = arith.extf %264 : vector<1x32xbf16> to vector<1x32xf32>
    %266 = vector.extract_strided_slice %258 {offsets = [0, 0], sizes = [16, 8], strides = [1, 1]} : vector<16x16xf32> to vector<16x8xf32>
    %267 = arith.truncf %266 : vector<16x8xf32> to vector<16x8xbf16>
    %cst_76 = arith.constant dense<0.000000e+00> : vector<16x32xf32>
    %268 = tpu.matmul %267, %259, %cst_76 {dimension_numbers = #tpu.dot_dimension_numbers<[1], [0], [0], [1], [0, 0, 1, 1], [], []>} : vector<16x8xbf16>, vector<8x32xbf16>, vector<16x32xf32> -> vector<16x32xf32>
    %269 = vector.broadcast %261 : vector<1x32xf32> to vector<16x32xf32>
    %270 = arith.addf %268, %269 : vector<16x32xf32>
    %271 = vector.extract_strided_slice %142 {offsets = [0, 0], sizes = [16, 32], strides = [1, 1]} : vector<32x32xf32> to vector<16x32xf32>
    %272 = arith.addf %270, %271 : vector<16x32xf32>
    %cst_77 = arith.constant dense<0.000000e+00> : vector<16xf32>
    %273 = vector.multi_reduction <add>, %272, %cst_77 [1] : vector<16x32xf32> to vector<16xf32>
    %274 = vector.shape_cast %273 : vector<16xf32> to vector<16x1xf32>
    %cst_78 = arith.constant 3.200000e+01 : f32
    %275 = vector.broadcast %cst_78 : f32 to vector<16x1xf32>
    %276 = arith.divf %274, %275 : vector<16x1xf32>
    %277 = vector.broadcast %276 : vector<16x1xf32> to vector<16x32xf32>
    %278 = arith.subf %272, %277 : vector<16x32xf32>
    %279 = arith.mulf %278, %278 : vector<16x32xf32>
    %cst_79 = arith.constant dense<0.000000e+00> : vector<16xf32>
    %280 = vector.multi_reduction <add>, %279, %cst_79 [1] : vector<16x32xf32> to vector<16xf32>
    %281 = vector.shape_cast %280 : vector<16xf32> to vector<16x1xf32>
    %cst_80 = arith.constant 3.200000e+01 : f32
    %282 = vector.broadcast %cst_80 : f32 to vector<16x1xf32>
    %283 = arith.divf %281, %282 : vector<16x1xf32>
    %284 = vector.broadcast %276 : vector<16x1xf32> to vector<16x32xf32>
    %285 = arith.subf %272, %284 : vector<16x32xf32>
    %cst_81 = arith.constant 9.99999974E-6 : f32
    %286 = vector.broadcast %cst_81 : f32 to vector<16x1xf32>
    %287 = arith.addf %283, %286 : vector<16x1xf32>
    %288 = math.rsqrt %287 : vector<16x1xf32>
    %289 = vector.broadcast %288 : vector<16x1xf32> to vector<16x32xf32>
    %290 = arith.mulf %285, %289 : vector<16x32xf32>
    %291 = vector.broadcast %263 : vector<1x32xf32> to vector<16x32xf32>
    %292 = arith.mulf %290, %291 : vector<16x32xf32>
    %293 = vector.broadcast %265 : vector<1x32xf32> to vector<16x32xf32>
    %294 = arith.addf %292, %293 : vector<16x32xf32>
    %c0_82 = arith.constant 0 : index
    %c0_83 = arith.constant 0 : index
    %295 = vector.load %arg3[%c0_82, %c0_83] : memref<32x32xf32, #tpu.memory_space<vmem>>, vector<16x32xf32>
    tpu.vector_store %arg3[%c0_82, %c0_83], %294 {strides = array<i32>} : memref<32x32xf32, #tpu.memory_space<vmem>>, vector<16x32xf32>,
    %296 = vector.extract_strided_slice %258 {offsets = [0, 8], sizes = [16, 8], strides = [1, 1]} : vector<16x16xf32> to vector<16x8xf32>
    %297 = arith.truncf %296 : vector<16x8xf32> to vector<16x8xbf16>
    %cst_84 = arith.constant dense<0.000000e+00> : vector<16x32xf32>
    %298 = tpu.matmul %297, %259, %cst_84 {dimension_numbers = #tpu.dot_dimension_numbers<[1], [0], [0], [1], [0, 0, 1, 1], [], []>} : vector<16x8xbf16>, vector<8x32xbf16>, vector<16x32xf32> -> vector<16x32xf32>
    %299 = vector.broadcast %261 : vector<1x32xf32> to vector<16x32xf32>
    %300 = arith.addf %298, %299 : vector<16x32xf32>
    %301 = vector.extract_strided_slice %142 {offsets = [16, 0], sizes = [16, 32], strides = [1, 1]} : vector<32x32xf32> to vector<16x32xf32>
    %302 = arith.addf %300, %301 : vector<16x32xf32>
    %cst_85 = arith.constant dense<0.000000e+00> : vector<16xf32>
    %303 = vector.multi_reduction <add>, %302, %cst_85 [1] : vector<16x32xf32> to vector<16xf32>
    %304 = vector.shape_cast %303 : vector<16xf32> to vector<16x1xf32>
    %cst_86 = arith.constant 3.200000e+01 : f32
    %305 = vector.broadcast %cst_86 : f32 to vector<16x1xf32>
    %306 = arith.divf %304, %305 : vector<16x1xf32>
    %307 = vector.broadcast %306 : vector<16x1xf32> to vector<16x32xf32>
    %308 = arith.subf %302, %307 : vector<16x32xf32>
    %309 = arith.mulf %308, %308 : vector<16x32xf32>
    %cst_87 = arith.constant dense<0.000000e+00> : vector<16xf32>
    %310 = vector.multi_reduction <add>, %309, %cst_87 [1] : vector<16x32xf32> to vector<16xf32>
    %311 = vector.shape_cast %310 : vector<16xf32> to vector<16x1xf32>
    %cst_88 = arith.constant 3.200000e+01 : f32
    %312 = vector.broadcast %cst_88 : f32 to vector<16x1xf32>
    %313 = arith.divf %311, %312 : vector<16x1xf32>
    %314 = vector.broadcast %306 : vector<16x1xf32> to vector<16x32xf32>
    %315 = arith.subf %302, %314 : vector<16x32xf32>
    %cst_89 = arith.constant 9.99999974E-6 : f32
    %316 = vector.broadcast %cst_89 : f32 to vector<16x1xf32>
    %317 = arith.addf %313, %316 : vector<16x1xf32>
    %318 = math.rsqrt %317 : vector<16x1xf32>
    %319 = vector.broadcast %318 : vector<16x1xf32> to vector<16x32xf32>
    %320 = arith.mulf %315, %319 : vector<16x32xf32>
    %321 = vector.broadcast %263 : vector<1x32xf32> to vector<16x32xf32>
    %322 = arith.mulf %320, %321 : vector<16x32xf32>
    %323 = vector.broadcast %265 : vector<1x32xf32> to vector<16x32xf32>
    %324 = arith.addf %322, %323 : vector<16x32xf32>
    %c16_90 = arith.constant 16 : index
    %c0_91 = arith.constant 0 : index
    %325 = vector.load %arg3[%c16_90, %c0_91] : memref<32x32xf32, #tpu.memory_space<vmem>>, vector<16x32xf32>
    tpu.vector_store %arg3[%c16_90, %c0_91], %324 {strides = array<i32>} : memref<32x32xf32, #tpu.memory_space<vmem>>, vector<16x32xf32>,
    return
  }
  func.func @transform_0(%arg0: i32) -> (i32, i32) {
    %c0_i32 = arith.constant 0 : i32
    %c0_i32_0 = arith.constant 0 : i32
    %c0_i32_1 = arith.constant 0 : i32
    return %c0_i32, %c0_i32_0 : i32, i32
  }
  func.func @transform_1(%arg0: i32) -> (i32, i32) {
    %c0_i32 = arith.constant 0 : i32
    %c0_i32_0 = arith.constant 0 : i32
    %c0_i32_1 = arith.constant 0 : i32
    return %c0_i32, %c0_i32_0 : i32, i32
  }
  func.func @transform_2(%arg0: i32) -> (i32, i32) {
    %c0_i32 = arith.constant 0 : i32
    %c0_i32_0 = arith.constant 0 : i32
    %c0_i32_1 = arith.constant 0 : i32
    return %c0_i32, %c0_i32_0 : i32, i32
  }
  func.func @transform_3(%arg0: i32) -> (i32, i32) {
    %c0_i32 = arith.constant 0 : i32
    %c0_i32_0 = arith.constant 0 : i32
    %c0_i32_1 = arith.constant 0 : i32
    return %c0_i32, %c0_i32_0 : i32, i32
  }
}

</mosaic_0001>

<llo_original>
// kernel: scfft_block.1
$region0: #{scfft_block.1}
  #allocation0 [shape = 'u32[]', space=smem, size = 0x4, offset = 0x4, fixed_abs, tag = 'smem constant byte address 0x4 - core index']
  #allocation1 [shape = 'u32[144,128]{1,0:T(1,128)}', space=vmem, size = 0x12000, scoped, tag = 'internal scratch']
  %s0 = inlined_call_operand.vmem [shape: f32[32,32], index: 0, kind: input, shape index: {}]
  %s1 = inlined_call_operand.vmem [shape: bf16[112,128], index: 1, kind: input, shape index: {}]
  %s2 = inlined_call_operand.hbm [shape: f32[32,32], index: 2, kind: output, shape index: {0}]
  %s3 = inlined_call_operand.hbm [shape: f32[64,16], index: 3, kind: output, shape index: {1}]
  %4 = xla_tuple %s2, %s3
  %s5 = sld [smem:[#allocation0]]
  $region26: #{scfft_block.1} parent=0
    _
  %s7 = ssub.s32 1, %s5
  %s8 = scalar_select 0, %s7, %s5
  $region1: #{scfft_block.1} parent=0
    #allocation2 [shape = 'u8[16384]{0}', space=vmem, size = 0x4000, scoped, tag = 'output window, operand 0, single buffered']
    #allocation3 [shape = 's32[1]{0}', space=sflag, size = 0x4, scoped, tag = 'scoped memory for scfft_block.1']
    #allocation4 [shape = 'u8[32768]{0}', space=vmem, size = 0x8000, scoped, tag = 'output window, operand 1, single buffered']
    #allocation5 [shape = 's32[1]{0}', space=sflag, size = 0x4, scoped, tag = 'scoped memory for scfft_block.1']
    %9 = vsyncpa [#allocation3], 0
    %10 = vsyncpa [#allocation5], 0
    // Predicated region
    $region2: #{scfft_block.1} parent=1 // pred_check
      _
    $region3: #{scfft_block.1} parent=1 // pred_check_branch
      %12 = sbr.rel (0) target = $region5
    $region4: #{scfft_block.1} parent=1 // pred_region
      _
    $region5: #{scfft_block.1} parent=1 // pred_fallthru
      _
    // Predicated region
    $region6: #{scfft_block.1} parent=1 // pred_check
      _
    $region7: #{scfft_block.1} parent=1 // pred_check_branch
      %14 = sbr.rel (0) target = $region9
    $region8: #{scfft_block.1} parent=1 // pred_region
      _
    $region9: #{scfft_block.1} parent=1 // pred_fallthru
      _
    %v16 = vld [vmem:[%s0] sm:$0xff]
    %v17 = vld [vmem:[%s0 + $0x8] sm:$0xff]
    %v18 = vld [vmem:[%s0 + $0x10] sm:$0xff]
    %v19 = vld [vmem:[%s0 + $0x18] sm:$0xff]
    %v20 = vld [vmem:[%s1] sm:$0xf]
    %v21 = vld [vmem:[%s1 + $0x4] sm:$0xf]
    %v22 = vld [vmem:[%s1 + $0x8] sm:$0xf]
    %v23 = vld [vmem:[%s1 + $0xc] sm:$0xf]
    %v24 = vld [vmem:[%s1 + $0x34] sm:$0x1]
    %v25 = vunpack.c.l.bf16 %v24
    %v26 = vpack.c.bf16 %v17, %v16
    %v27 = vpack.c.bf16 %v19, %v18
    %v28 = vlaneseq
    %v29 = vshrl.u32 %v28, 7
    %v30 = vsub.s32 1, %v29
    %v31 = vrot.slane %v25, %v30
    %v36 = vunpack.c.l.b16 %v20
    %v37 = vunpack.c.l.b16 %v21
    %v38 = vunpack.c.l.b16 %v22
    %v39 = vunpack.c.l.b16 %v23
    %v40 = vpack.c.b16 %v37, %v36
    %v41 = vpack.c.b16 %v39, %v38
    %vm44 = vcmask 261120
    %v46 = vsel %vm44, %v26, 0
    %v49 = vsel %vm44, %v27, 0
    %51 = vmatprep.subr.bf16.mxu0 0
    %52 = vmatpush1.bf16.msra.mxu0 %v40
    %53 = vmatprep.subr.bf16.mxu0 0
    %54 = vmatpush1.bf16.msra.mxu0 %v41
    %55 = vmatprep.subr.bf16.mxu0 0
    %56 = vmatpush1.bf16.msra.mxu0 0
    %57 = vmatprep.subr.bf16.mxu0 0
    %58 = vmatpush1.bf16.msra.mxu0 0
    %59 = vmatprep.subr.bf16.mxu0 0
    %60 = vmatpush1.bf16.msra.mxu0 0
    %61 = vmatprep.subr.bf16.mxu0 0
    %62 = vmatpush1.bf16.msra.mxu0 0
    %63 = vmatprep.subr.bf16.mxu0 0
    %64 = vmatpush1.bf16.msra.mxu0 0
    %65 = vmatprep.subr.bf16.mxu0 0
    %66 = vmatpush1.bf16.msra.mxu0 0
    %67 = vmatprep.subr.bf16.mxu0 0
    %68 = vmatpush1.bf16.msra.mxu0 0
    %69 = vmatprep.subr.bf16.mxu0 0
    %70 = vmatpush1.bf16.msra.mxu0 0
    %71 = vmatprep.subr.bf16.mxu0 0
    %72 = vmatpush1.bf16.msra.mxu0 0
    %73 = vmatprep.subr.bf16.mxu0 0
    %74 = vmatpush1.bf16.msra.mxu0 0
    %75 = vmatprep.subr.bf16.mxu0 0
    %76 = vmatpush1.bf16.msra.mxu0 0
    %77 = vmatprep.subr.bf16.mxu0 0
    %78 = vmatpush1.bf16.msra.mxu0 0
    %79 = vmatprep.subr.bf16.mxu0 0
    %80 = vmatpush1.bf16.msra.mxu0 0
    %81 = vmatprep.subr.bf16.mxu0 0
    %82 = vmatpush1.bf16.msra.mxu0 0
    %83 = vmatprep.mubr.bf16.mxu0 0
    %84 = vmatmul.mubr.bf16.gmra.mrb[0].mxu0 %v46
    %v85 = vpop.f32.mrb[0].mxu0
    %v86 = vadd.f32 %v31, %v85
    %v87 = vpop.f32.mrb[0].mxu0
    %v88 = vpop.f32.mrb[0].mxu0
    %v89 = vadd.f32 %v31, %v88
    %v90 = vpop.f32.mrb[0].mxu0
    %91 = vmatprep.mubr.bf16.mxu0 0
    %92 = vmatmul.mubr.bf16.gmra.mrb[0].mxu0 %v49
    %v93 = vpop.f32.mrb[0].mxu0
    %v94 = vadd.f32 %v31, %v93
    %v95 = vpop.f32.mrb[0].mxu0
    %v96 = vpop.f32.mrb[0].mxu0
    %v97 = vadd.f32 %v31, %v96
    %v98 = vpop.f32.mrb[0].mxu0
    %99 = vdwg.mxu0
    %v100 = vpack.c.bf16 %v89, %v86
    %v101 = vpack.c.bf16 %v97, %v94
    %103 = vrot.lane.b32.xlu0 %v31, 32
    %v104 = vpop.permute.xlu0 %103
    %v106 = vadd.f32 %v16, %v104
    %v107 = vadd.f32 %v17, %v104
    %109 = vrot.lane.b32.xlu0 %v100, 96
    %v110 = vpop.permute.xlu0 %109
    %vm111 = vcmask 130048
    %v113 = vsel %vm111, %v100, 0
    %v116 = vsel %vm111, %v110, 0
    %118 = vmatprep.subr.bf16.mxu0 0
    %119 = vmatpush1.bf16.xpose.msra.mxu0 %v116
    %120 = vmatprep.subr.bf16.mxu0 0
    %121 = vmatpush1.bf16.xpose.msra.mxu0 0
    %122 = vmatprep.subr.bf16.mxu0 0
    %123 = vmatpush1.bf16.xpose.msra.mxu0 0
    %124 = vmatprep.subr.bf16.mxu0 0
    %125 = vmatpush1.bf16.xpose.msra.mxu0 0
    %126 = vmatprep.subr.bf16.mxu0 0
    %127 = vmatpush1.bf16.xpose.msra.mxu0 0
    %128 = vmatprep.subr.bf16.mxu0 0
    %129 = vmatpush1.bf16.xpose.msra.mxu0 0
    %130 = vmatprep.subr.bf16.mxu0 0
    %131 = vmatpush1.bf16.xpose.msra.mxu0 0
    %132 = vmatprep.subr.bf16.mxu0 0
    %133 = vmatpush1.bf16.xpose.msra.mxu0 0
    %134 = vmatprep.subr.bf16.mxu0 0
    %135 = vmatpush1.bf16.xpose.msra.mxu0 0
    %136 = vmatprep.subr.bf16.mxu0 0
    %137 = vmatpush1.bf16.xpose.msra.mxu0 0
    %138 = vmatprep.subr.bf16.mxu0 0
    %139 = vmatpush1.bf16.xpose.msra.mxu0 0
    %140 = vmatprep.subr.bf16.mxu0 0
    %141 = vmatpush1.bf16.xpose.msra.mxu0 0
    %142 = vmatprep.subr.bf16.mxu0 0
    %143 = vmatpush1.bf16.xpose.msra.mxu0 0
    %144 = vmatprep.subr.bf16.mxu0 0
    %145 = vmatpush1.bf16.xpose.msra.mxu0 0
    %146 = vmatprep.subr.bf16.mxu0 0
    %147 = vmatpush1.bf16.xpose.msra.mxu0 0
    %148 = vmatprep.subr.bf16.mxu0 0
    %149 = vmatpush1.bf16.xpose.msra.mxu0 0
    %150 = vmatprep.mubr.bf16.mxu0 0
    %151 = vmatmul.mubr.bf16.gmra.mrb[0].mxu0 %v113
    %v152 = vpop.f32.mrb[0].mxu0
    %v153 = vadd.f32 0.0, %v152
    %v154 = vpop.f32.mrb[0].mxu0
    %v155 = vpop.f32.mrb[0].mxu0
    %v156 = vadd.f32 0.0, %v155
    %v157 = vpop.f32.mrb[0].mxu0
    %158 = vdwg.mxu0
    %v159 = vmul.f32 %v153, 0.25
    %v160 = vmul.f32 %v156, 0.25
    %v161 = vsel %vm111, %v159, -inf
    %162 = vmax.xlane.f32.xlu0 %v161
    %v163 = vpop.xlane.xlu0 %162
    %v164 = vsel %vm111, %v160, -inf
    %165 = vmax.xlane.f32.xlu0 %v164
    %v166 = vpop.xlane.xlu0 %165
    %v167 = vsub.f32 %v159, %v163
    %v168 = vsub.f32 %v160, %v166
    %v169 = vmul.f32 %v167, 1.442695
    %v170 = vpow.pop %v169
    %v171 = vmul.f32 %v168, 1.442695
    %v172 = vpow.pop %v171
    %v173 = vsel %vm111, %v170, 0.0
    %174 = vadd.xlane.f32.xlu0 %v173
    %v175 = vpop.xlane.xlu0 %174
    %v176 = vsel %vm111, %v172, 0.0
    %177 = vadd.xlane.f32.xlu0 %v176
    %v178 = vpop.xlane.xlu0 %177
    %v179 = vrcp.pop %v175
    %v180 = vrcp.pop %v178
    %v181 = vmul.f32 %v170, %v179
    %v182 = vmul.f32 %v172, %v180
    %183 = vst.msk [vmem:[#allocation4] sm:$0xff] %vm111, %v181
    %184 = vst.msk [vmem:[#allocation4 + $0x8] sm:$0xff] %vm111, %v182
    %v185 = vpack.c.bf16 %v182, %v181
    %186 = vrot.lane.b32.xlu0 %v100, 64
    %v187 = vpop.permute.xlu0 %186
    %v190 = vsel %vm111, %v185, 0
    %192 = vmatprep.subr.bf16.mxu0 0
    %193 = vmatpush1.bf16.msra.mxu0 %v187
    %194 = vmatprep.subr.bf16.mxu0 0
    %195 = vmatpush1.bf16.msra.mxu0 0
    %196 = vmatprep.subr.bf16.mxu0 0
    %197 = vmatpush1.bf16.msra.mxu0 0
    %198 = vmatprep.subr.bf16.mxu0 0
    %199 = vmatpush1.bf16.msra.mxu0 0
    %200 = vmatprep.subr.bf16.mxu0 0
    %201 = vmatpush1.bf16.msra.mxu0 0
    %202 = vmatprep.subr.bf16.mxu0 0
    %203 = vmatpush1.bf16.msra.mxu0 0
    %204 = vmatprep.subr.bf16.mxu0 0
    %205 = vmatpush1.bf16.msra.mxu0 0
    %206 = vmatprep.subr.bf16.mxu0 0
    %207 = vmatpush1.bf16.msra.mxu0 0
    %208 = vmatprep.subr.bf16.mxu0 0
    %209 = vmatpush1.bf16.msra.mxu0 0
    %210 = vmatprep.subr.bf16.mxu0 0
    %211 = vmatpush1.bf16.msra.mxu0 0
    %212 = vmatprep.subr.bf16.mxu0 0
    %213 = vmatpush1.bf16.msra.mxu0 0
    %214 = vmatprep.subr.bf16.mxu0 0
    %215 = vmatpush1.bf16.msra.mxu0 0
    %216 = vmatprep.subr.bf16.mxu0 0
    %217 = vmatpush1.bf16.msra.mxu0 0
    %218 = vmatprep.subr.bf16.mxu0 0
    %219 = vmatpush1.bf16.msra.mxu0 0
    %220 = vmatprep.subr.bf16.mxu0 0
    %221 = vmatpush1.bf16.msra.mxu0 0
    %222 = vmatprep.subr.bf16.mxu0 0
    %223 = vmatpush1.bf16.msra.mxu0 0
    %224 = vmatprep.mubr.bf16.mxu0 0
    %225 = vmatmul.mubr.bf16.gmra.mrb[0].mxu0 %v190
    %v226 = vpop.f32.mrb[0].mxu0
    %v227 = vadd.f32 0.0, %v226
    %v228 = vpop.f32.mrb[0].mxu0
    %v229 = vpop.f32.mrb[0].mxu0
    %v230 = vadd.f32 0.0, %v229
    %v231 = vpop.f32.mrb[0].mxu0
    %232 = vdwg.mxu0
    %v233 = vpack.c.bf16 %v230, %v227
    %234 = vrot.lane.b32.xlu0 %v40, 32
    %v235 = vpop.permute.xlu0 %234
    %v238 = vsel %vm111, %v233, 0
    %240 = vmatprep.subr.bf16.mxu0 0
    %241 = vmatpush1.bf16.msra.mxu0 %v235
    %242 = vmatprep.subr.bf16.mxu0 0
    %243 = vmatpush1.bf16.msra.mxu0 0
    %244 = vmatprep.subr.bf16.mxu0 0
    %245 = vmatpush1.bf16.msra.mxu0 0
    %246 = vmatprep.subr.bf16.mxu0 0
    %247 = vmatpush1.bf16.msra.mxu0 0
    %248 = vmatprep.subr.bf16.mxu0 0
    %249 = vmatpush1.bf16.msra.mxu0 0
    %250 = vmatprep.subr.bf16.mxu0 0
    %251 = vmatpush1.bf16.msra.mxu0 0
    %252 = vmatprep.subr.bf16.mxu0 0
    %253 = vmatpush1.bf16.msra.mxu0 0
    %254 = vmatprep.subr.bf16.mxu0 0
    %255 = vmatpush1.bf16.msra.mxu0 0
    %256 = vmatprep.subr.bf16.mxu0 0
    %257 = vmatpush1.bf16.msra.mxu0 0
    %258 = vmatprep.subr.bf16.mxu0 0
    %259 = vmatpush1.bf16.msra.mxu0 0
    %260 = vmatprep.subr.bf16.mxu0 0
    %261 = vmatpush1.bf16.msra.mxu0 0
    %262 = vmatprep.subr.bf16.mxu0 0
    %263 = vmatpush1.bf16.msra.mxu0 0
    %264 = vmatprep.subr.bf16.mxu0 0
    %265 = vmatpush1.bf16.msra.mxu0 0
    %266 = vmatprep.subr.bf16.mxu0 0
    %267 = vmatpush1.bf16.msra.mxu0 0
    %268 = vmatprep.subr.bf16.mxu0 0
    %269 = vmatpush1.bf16.msra.mxu0 0
    %270 = vmatprep.subr.bf16.mxu0 0
    %271 = vmatpush1.bf16.msra.mxu0 0
    %272 = vmatprep.mubr.bf16.mxu0 0
    %273 = vmatmul.mubr.bf16.gmra.mrb[0].mxu0 %v238
    %v274 = vpop.f32.mrb[0].mxu0
    %v275 = vadd.f32 0.0, %v274
    %v276 = vpop.f32.mrb[0].mxu0
    %v277 = vpop.f32.mrb[0].mxu0
    %v278 = vadd.f32 0.0, %v277
    %v279 = vpop.f32.mrb[0].mxu0
    %280 = vdwg.mxu0
    %v281 = vadd.f32 %v106, %v275
    %v282 = vadd.f32 %v107, %v278
    %283 = vrot.lane.b32.xlu0 %v100, 112
    %v284 = vpop.permute.xlu0 %283
    %285 = vrot.lane.b32.xlu0 %v100, 80
    %v286 = vpop.permute.xlu0 %285
    %v288 = vsel %vm111, %v284, 0
    %v291 = vsel %vm111, %v286, 0
    %293 = vmatprep.subr.bf16.mxu0 0
    %294 = vmatpush1.bf16.xpose.msra.mxu0 %v291
    %295 = vmatprep.subr.bf16.mxu0 0
    %296 = vmatpush1.bf16.xpose.msra.mxu0 0
    %297 = vmatprep.subr.bf16.mxu0 0
    %298 = vmatpush1.bf16.xpose.msra.mxu0 0
    %299 = vmatprep.subr.bf16.mxu0 0
    %300 = vmatpush1.bf16.xpose.msra.mxu0 0
    %301 = vmatprep.subr.bf16.mxu0 0
    %302 = vmatpush1.bf16.xpose.msra.mxu0 0
    %303 = vmatprep.subr.bf16.mxu0 0
    %304 = vmatpush1.bf16.xpose.msra.mxu0 0
    %305 = vmatprep.subr.bf16.mxu0 0
    %306 = vmatpush1.bf16.xpose.msra.mxu0 0
    %307 = vmatprep.subr.bf16.mxu0 0
    %308 = vmatpush1.bf16.xpose.msra.mxu0 0
    %309 = vmatprep.subr.bf16.mxu0 0
    %310 = vmatpush1.bf16.xpose.msra.mxu0 0
    %311 = vmatprep.subr.bf16.mxu0 0
    %312 = vmatpush1.bf16.xpose.msra.mxu0 0
    %313 = vmatprep.subr.bf16.mxu0 0
    %314 = vmatpush1.bf16.xpose.msra.mxu0 0
    %315 = vmatprep.subr.bf16.mxu0 0
    %316 = vmatpush1.bf16.xpose.msra.mxu0 0
    %317 = vmatprep.subr.bf16.mxu0 0
    %318 = vmatpush1.bf16.xpose.msra.mxu0 0
    %319 = vmatprep.subr.bf16.mxu0 0
    %320 = vmatpush1.bf16.xpose.msra.mxu0 0
    %321 = vmatprep.subr.bf16.mxu0 0
    %322 = vmatpush1.bf16.xpose.msra.mxu0 0
    %323 = vmatprep.subr.bf16.mxu0 0
    %324 = vmatpush1.bf16.xpose.msra.mxu0 0
    %325 = vmatprep.mubr.bf16.mxu0 0
    %326 = vmatmul.mubr.bf16.gmra.mrb[0].mxu0 %v288
    %v327 = vpop.f32.mrb[0].mxu0
    %v328 = vadd.f32 0.0, %v327
    %v329 = vpop.f32.mrb[0].mxu0
    %v330 = vpop.f32.mrb[0].mxu0
    %v331 = vadd.f32 0.0, %v330
    %v332 = vpop.f32.mrb[0].mxu0
    %333 = vdwg.mxu0
    %v334 = vmul.f32 %v328, 0.25
    %v335 = vmul.f32 %v331, 0.25
    %v336 = vsel %vm111, %v334, -inf
    %337 = vmax.xlane.f32.xlu0 %v336
    %v338 = vpop.xlane.xlu0 %337
    %v339 = vsel %vm111, %v335, -inf
    %340 = vmax.xlane.f32.xlu0 %v339
    %v341 = vpop.xlane.xlu0 %340
    %v342 = vsub.f32 %v334, %v338
    %v343 = vsub.f32 %v335, %v341
    %v344 = vmul.f32 %v342, 1.442695
    %v345 = vpow.pop %v344
    %v346 = vmul.f32 %v343, 1.442695
    %v347 = vpow.pop %v346
    %v348 = vsel %vm111, %v345, 0.0
    %349 = vadd.xlane.f32.xlu0 %v348
    %v350 = vpop.xlane.xlu0 %349
    %v351 = vsel %vm111, %v347, 0.0
    %352 = vadd.xlane.f32.xlu0 %v351
    %v353 = vpop.xlane.xlu0 %352
    %v354 = vrcp.pop %v350
    %v355 = vrcp.pop %v353
    %v356 = vmul.f32 %v345, %v354
    %v357 = vmul.f32 %v347, %v355
    %358 = vst.msk [vmem:[#allocation4 + $0x10] sm:$0xff] %vm111, %v356
    %359 = vst.msk [vmem:[#allocation4 + $0x18] sm:$0xff] %vm111, %v357
    %v360 = vpack.c.bf16 %v357, %v356
    %361 = vrot.lane.b32.xlu0 %v100, 48
    %v362 = vpop.permute.xlu0 %361
    %v365 = vsel %vm111, %v360, 0
    %367 = vmatprep.subr.bf16.mxu0 0
    %368 = vmatpush1.bf16.msra.mxu0 %v362
    %369 = vmatprep.subr.bf16.mxu0 0
    %370 = vmatpush1.bf16.msra.mxu0 0
    %371 = vmatprep.subr.bf16.mxu0 0
    %372 = vmatpush1.bf16.msra.mxu0 0
    %373 = vmatprep.subr.bf16.mxu0 0
    %374 = vmatpush1.bf16.msra.mxu0 0
    %375 = vmatprep.subr.bf16.mxu0 0
    %376 = vmatpush1.bf16.msra.mxu0 0
    %377 = vmatprep.subr.bf16.mxu0 0
    %378 = vmatpush1.bf16.msra.mxu0 0
    %379 = vmatprep.subr.bf16.mxu0 0
    %380 = vmatpush1.bf16.msra.mxu0 0
    %381 = vmatprep.subr.bf16.mxu0 0
    %382 = vmatpush1.bf16.msra.mxu0 0
    %383 = vmatprep.subr.bf16.mxu0 0
    %384 = vmatpush1.bf16.msra.mxu0 0
    %385 = vmatprep.subr.bf16.mxu0 0
    %386 = vmatpush1.bf16.msra.mxu0 0
    %387 = vmatprep.subr.bf16.mxu0 0
    %388 = vmatpush1.bf16.msra.mxu0 0
    %389 = vmatprep.subr.bf16.mxu0 0
    %390 = vmatpush1.bf16.msra.mxu0 0
    %391 = vmatprep.subr.bf16.mxu0 0
    %392 = vmatpush1.bf16.msra.mxu0 0
    %393 = vmatprep.subr.bf16.mxu0 0
    %394 = vmatpush1.bf16.msra.mxu0 0
    %395 = vmatprep.subr.bf16.mxu0 0
    %396 = vmatpush1.bf16.msra.mxu0 0
    %397 = vmatprep.subr.bf16.mxu0 0
    %398 = vmatpush1.bf16.msra.mxu0 0
    %399 = vmatprep.mubr.bf16.mxu0 0
    %400 = vmatmul.mubr.bf16.gmra.mrb[0].mxu0 %v365
    %v401 = vpop.f32.mrb[0].mxu0
    %v402 = vadd.f32 0.0, %v401
    %v403 = vpop.f32.mrb[0].mxu0
    %v404 = vpop.f32.mrb[0].mxu0
    %v405 = vadd.f32 0.0, %v404
    %v406 = vpop.f32.mrb[0].mxu0
    %407 = vdwg.mxu0
    %v408 = vpack.c.bf16 %v405, %v402
    %409 = vrot.lane.b32.xlu0 %v41, 32
    %v410 = vpop.permute.xlu0 %409
    %v413 = vsel %vm111, %v408, 0
    %415 = vmatprep.subr.bf16.mxu0 0
    %416 = vmatpush1.bf16.msra.mxu0 %v410
    %417 = vmatprep.subr.bf16.mxu0 0
    %418 = vmatpush1.bf16.msra.mxu0 0
    %419 = vmatprep.subr.bf16.mxu0 0
    %420 = vmatpush1.bf16.msra.mxu0 0
    %421 = vmatprep.subr.bf16.mxu0 0
    %422 = vmatpush1.bf16.msra.mxu0 0
    %423 = vmatprep.subr.bf16.mxu0 0
    %424 = vmatpush1.bf16.msra.mxu0 0
    %425 = vmatprep.subr.bf16.mxu0 0
    %426 = vmatpush1.bf16.msra.mxu0 0
    %427 = vmatprep.subr.bf16.mxu0 0
    %428 = vmatpush1.bf16.msra.mxu0 0
    %429 = vmatprep.subr.bf16.mxu0 0
    %430 = vmatpush1.bf16.msra.mxu0 0
    %431 = vmatprep.subr.bf16.mxu0 0
    %432 = vmatpush1.bf16.msra.mxu0 0
    %433 = vmatprep.subr.bf16.mxu0 0
    %434 = vmatpush1.bf16.msra.mxu0 0
    %435 = vmatprep.subr.bf16.mxu0 0
    %436 = vmatpush1.bf16.msra.mxu0 0
    %437 = vmatprep.subr.bf16.mxu0 0
    %438 = vmatpush1.bf16.msra.mxu0 0
    %439 = vmatprep.subr.bf16.mxu0 0
    %440 = vmatpush1.bf16.msra.mxu0 0
    %441 = vmatprep.subr.bf16.mxu0 0
    %442 = vmatpush1.bf16.msra.mxu0 0
    %443 = vmatprep.subr.bf16.mxu0 0
    %444 = vmatpush1.bf16.msra.mxu0 0
    %445 = vmatprep.subr.bf16.mxu0 0
    %446 = vmatpush1.bf16.msra.mxu0 0
    %447 = vmatprep.mubr.bf16.mxu0 0
    %448 = vmatmul.mubr.bf16.gmra.mrb[0].mxu0 %v413
    %v449 = vpop.f32.mrb[0].mxu0
    %v450 = vadd.f32 0.0, %v449
    %v451 = vpop.f32.mrb[0].mxu0
    %v452 = vpop.f32.mrb[0].mxu0
    %v453 = vadd.f32 0.0, %v452
    %v454 = vpop.f32.mrb[0].mxu0
    %455 = vdwg.mxu0
    %v456 = vadd.f32 %v281, %v450
    %v457 = vadd.f32 %v282, %v453
    %v458 = vadd.f32 %v18, %v104
    %v459 = vadd.f32 %v19, %v104
    %461 = vrot.lane.b32.xlu0 %v101, 96
    %v462 = vpop.permute.xlu0 %461
    %v464 = vsel %vm111, %v101, 0
    %v467 = vsel %vm111, %v462, 0
    %469 = vmatprep.subr.bf16.mxu0 0
    %470 = vmatpush1.bf16.xpose.msra.mxu0 %v467
    %471 = vmatprep.subr.bf16.mxu0 0
    %472 = vmatpush1.bf16.xpose.msra.mxu0 0
    %473 = vmatprep.subr.bf16.mxu0 0
    %474 = vmatpush1.bf16.xpose.msra.mxu0 0
    %475 = vmatprep.subr.bf16.mxu0 0
    %476 = vmatpush1.bf16.xpose.msra.mxu0 0
    %477 = vmatprep.subr.bf16.mxu0 0
    %478 = vmatpush1.bf16.xpose.msra.mxu0 0
    %479 = vmatprep.subr.bf16.mxu0 0
    %480 = vmatpush1.bf16.xpose.msra.mxu0 0
    %481 = vmatprep.subr.bf16.mxu0 0
    %482 = vmatpush1.bf16.xpose.msra.mxu0 0
    %483 = vmatprep.subr.bf16.mxu0 0
    %484 = vmatpush1.bf16.xpose.msra.mxu0 0
    %485 = vmatprep.subr.bf16.mxu0 0
    %486 = vmatpush1.bf16.xpose.msra.mxu0 0
    %487 = vmatprep.subr.bf16.mxu0 0
    %488 = vmatpush1.bf16.xpose.msra.mxu0 0
    %489 = vmatprep.subr.bf16.mxu0 0
    %490 = vmatpush1.bf16.xpose.msra.mxu0 0
    %491 = vmatprep.subr.bf16.mxu0 0
    %492 = vmatpush1.bf16.xpose.msra.mxu0 0
    %493 = vmatprep.subr.bf16.mxu0 0
    %494 = vmatpush1.bf16.xpose.msra.mxu0 0
    %495 = vmatprep.subr.bf16.mxu0 0
    %496 = vmatpush1.bf16.xpose.msra.mxu0 0
    %497 = vmatprep.subr.bf16.mxu0 0
    %498 = vmatpush1.bf16.xpose.msra.mxu0 0
    %499 = vmatprep.subr.bf16.mxu0 0
    %500 = vmatpush1.bf16.xpose.msra.mxu0 0
    %501 = vmatprep.mubr.bf16.mxu0 0
    %502 = vmatmul.mubr.bf16.gmra.mrb[0].mxu0 %v464
    %v503 = vpop.f32.mrb[0].mxu0
    %v504 = vadd.f32 0.0, %v503
    %v505 = vpop.f32.mrb[0].mxu0
    %v506 = vpop.f32.mrb[0].mxu0
    %v507 = vadd.f32 0.0, %v506
    %v508 = vpop.f32.mrb[0].mxu0
    %509 = vdwg.mxu0
    %v510 = vmul.f32 %v504, 0.25
    %v511 = vmul.f32 %v507, 0.25
    %v512 = vsel %vm111, %v510, -inf
    %513 = vmax.xlane.f32.xlu0 %v512
    %v514 = vpop.xlane.xlu0 %513
    %v515 = vsel %vm111, %v511, -inf
    %516 = vmax.xlane.f32.xlu0 %v515
    %v517 = vpop.xlane.xlu0 %516
    %v518 = vsub.f32 %v510, %v514
    %v519 = vsub.f32 %v511, %v517
    %v520 = vmul.f32 %v518, 1.442695
    %v521 = vpow.pop %v520
    %v522 = vmul.f32 %v519, 1.442695
    %v523 = vpow.pop %v522
    %v524 = vsel %vm111, %v521, 0.0
    %525 = vadd.xlane.f32.xlu0 %v524
    %v526 = vpop.xlane.xlu0 %525
    %v527 = vsel %vm111, %v523, 0.0
    %528 = vadd.xlane.f32.xlu0 %v527
    %v529 = vpop.xlane.xlu0 %528
    %v530 = vrcp.pop %v526
    %v531 = vrcp.pop %v529
    %v532 = vmul.f32 %v521, %v530
    %v533 = vmul.f32 %v523, %v531
    %534 = vst.msk [vmem:[#allocation4 + $0x20] sm:$0xff] %vm111, %v532
    %535 = vst.msk [vmem:[#allocation4 + $0x28] sm:$0xff] %vm111, %v533
    %v536 = vpack.c.bf16 %v533, %v532
    %537 = vrot.lane.b32.xlu0 %v101, 64
    %v538 = vpop.permute.xlu0 %537
    %v541 = vsel %vm111, %v536, 0
    %543 = vmatprep.subr.bf16.mxu0 0
    %544 = vmatpush1.bf16.msra.mxu0 %v538
    %545 = vmatprep.subr.bf16.mxu0 0
    %546 = vmatpush1.bf16.msra.mxu0 0
    %547 = vmatprep.subr.bf16.mxu0 0
    %548 = vmatpush1.bf16.msra.mxu0 0
    %549 = vmatprep.subr.bf16.mxu0 0
    %550 = vmatpush1.bf16.msra.mxu0 0
    %551 = vmatprep.subr.bf16.mxu0 0
    %552 = vmatpush1.bf16.msra.mxu0 0
    %553 = vmatprep.subr.bf16.mxu0 0
    %554 = vmatpush1.bf16.msra.mxu0 0
    %555 = vmatprep.subr.bf16.mxu0 0
    %556 = vmatpush1.bf16.msra.mxu0 0
    %557 = vmatprep.subr.bf16.mxu0 0
    %558 = vmatpush1.bf16.msra.mxu0 0
    %559 = vmatprep.subr.bf16.mxu0 0
    %560 = vmatpush1.bf16.msra.mxu0 0
    %561 = vmatprep.subr.bf16.mxu0 0
    %562 = vmatpush1.bf16.msra.mxu0 0
    %563 = vmatprep.subr.bf16.mxu0 0
    %564 = vmatpush1.bf16.msra.mxu0 0
    %565 = vmatprep.subr.bf16.mxu0 0
    %566 = vmatpush1.bf16.msra.mxu0 0
    %567 = vmatprep.subr.bf16.mxu0 0
    %568 = vmatpush1.bf16.msra.mxu0 0
    %569 = vmatprep.subr.bf16.mxu0 0
    %570 = vmatpush1.bf16.msra.mxu0 0
    %571 = vmatprep.subr.bf16.mxu0 0
    %572 = vmatpush1.bf16.msra.mxu0 0
    %573 = vmatprep.subr.bf16.mxu0 0
    %574 = vmatpush1.bf16.msra.mxu0 0
    %575 = vmatprep.mubr.bf16.mxu0 0
    %576 = vmatmul.mubr.bf16.gmra.mrb[0].mxu0 %v541
    %v577 = vpop.f32.mrb[0].mxu0
    %v578 = vadd.f32 0.0, %v577
    %v579 = vpop.f32.mrb[0].mxu0
    %v580 = vpop.f32.mrb[0].mxu0
    %v581 = vadd.f32 0.0, %v580
    %v582 = vpop.f32.mrb[0].mxu0
    %583 = vdwg.mxu0
    %v584 = vpack.c.bf16 %v581, %v578
    %v586 = vsel %vm111, %v584, 0
    %588 = vmatprep.subr.bf16.mxu0 0
    %589 = vmatpush1.bf16.msra.mxu0 %v235
    %590 = vmatprep.subr.bf16.mxu0 0
    %591 = vmatpush1.bf16.msra.mxu0 0
    %592 = vmatprep.subr.bf16.mxu0 0
    %593 = vmatpush1.bf16.msra.mxu0 0
    %594 = vmatprep.subr.bf16.mxu0 0
    %595 = vmatpush1.bf16.msra.mxu0 0
    %596 = vmatprep.subr.bf16.mxu0 0
    %597 = vmatpush1.bf16.msra.mxu0 0
    %598 = vmatprep.subr.bf16.mxu0 0
    %599 = vmatpush1.bf16.msra.mxu0 0
    %600 = vmatprep.subr.bf16.mxu0 0
    %601 = vmatpush1.bf16.msra.mxu0 0
    %602 = vmatprep.subr.bf16.mxu0 0
    %603 = vmatpush1.bf16.msra.mxu0 0
    %604 = vmatprep.subr.bf16.mxu0 0
    %605 = vmatpush1.bf16.msra.mxu0 0
    %606 = vmatprep.subr.bf16.mxu0 0
    %607 = vmatpush1.bf16.msra.mxu0 0
    %608 = vmatprep.subr.bf16.mxu0 0
    %609 = vmatpush1.bf16.msra.mxu0 0
    %610 = vmatprep.subr.bf16.mxu0 0
    %611 = vmatpush1.bf16.msra.mxu0 0
    %612 = vmatprep.subr.bf16.mxu0 0
    %613 = vmatpush1.bf16.msra.mxu0 0
    %614 = vmatprep.subr.bf16.mxu0 0
    %615 = vmatpush1.bf16.msra.mxu0 0
    %616 = vmatprep.subr.bf16.mxu0 0
    %617 = vmatpush1.bf16.msra.mxu0 0
    %618 = vmatprep.subr.bf16.mxu0 0
    %619 = vmatpush1.bf16.msra.mxu0 0
    %620 = vmatprep.mubr.bf16.mxu0 0
    %621 = vmatmul.mubr.bf16.gmra.mrb[0].mxu0 %v586
    %v622 = vpop.f32.mrb[0].mxu0
    %v623 = vadd.f32 0.0, %v622
    %v624 = vpop.f32.mrb[0].mxu0
    %v625 = vpop.f32.mrb[0].mxu0
    %v626 = vadd.f32 0.0, %v625
    %v627 = vpop.f32.mrb[0].mxu0
    %628 = vdwg.mxu0
    %v629 = vadd.f32 %v458, %v623
    %v630 = vadd.f32 %v459, %v626
    %631 = vrot.lane.b32.xlu0 %v101, 112
    %v632 = vpop.permute.xlu0 %631
    %633 = vrot.lane.b32.xlu0 %v101, 80
    %v634 = vpop.permute.xlu0 %633
    %v636 = vsel %vm111, %v632, 0
    %v639 = vsel %vm111, %v634, 0
    %641 = vmatprep.subr.bf16.mxu0 0
    %642 = vmatpush1.bf16.xpose.msra.mxu0 %v639
    %643 = vmatprep.subr.bf16.mxu0 0
    %644 = vmatpush1.bf16.xpose.msra.mxu0 0
    %645 = vmatprep.subr.bf16.mxu0 0
    %646 = vmatpush1.bf16.xpose.msra.mxu0 0
    %647 = vmatprep.subr.bf16.mxu0 0
    %648 = vmatpush1.bf16.xpose.msra.mxu0 0
    %649 = vmatprep.subr.bf16.mxu0 0
    %650 = vmatpush1.bf16.xpose.msra.mxu0 0
    %651 = vmatprep.subr.bf16.mxu0 0
    %652 = vmatpush1.bf16.xpose.msra.mxu0 0
    %653 = vmatprep.subr.bf16.mxu0 0
    %654 = vmatpush1.bf16.xpose.msra.mxu0 0
    %655 = vmatprep.subr.bf16.mxu0 0
    %656 = vmatpush1.bf16.xpose.msra.mxu0 0
    %657 = vmatprep.subr.bf16.mxu0 0
    %658 = vmatpush1.bf16.xpose.msra.mxu0 0
    %659 = vmatprep.subr.bf16.mxu0 0
    %660 = vmatpush1.bf16.xpose.msra.mxu0 0
    %661 = vmatprep.subr.bf16.mxu0 0
    %662 = vmatpush1.bf16.xpose.msra.mxu0 0
    %663 = vmatprep.subr.bf16.mxu0 0
    %664 = vmatpush1.bf16.xpose.msra.mxu0 0
    %665 = vmatprep.subr.bf16.mxu0 0
    %666 = vmatpush1.bf16.xpose.msra.mxu0 0
    %667 = vmatprep.subr.bf16.mxu0 0
    %668 = vmatpush1.bf16.xpose.msra.mxu0 0
    %669 = vmatprep.subr.bf16.mxu0 0
    %670 = vmatpush1.bf16.xpose.msra.mxu0 0
    %671 = vmatprep.subr.bf16.mxu0 0
    %672 = vmatpush1.bf16.xpose.msra.mxu0 0
    %673 = vmatprep.mubr.bf16.mxu0 0
    %674 = vmatmul.mubr.bf16.gmra.mrb[0].mxu0 %v636
    %v675 = vpop.f32.mrb[0].mxu0
    %v676 = vadd.f32 0.0, %v675
    %v677 = vpop.f32.mrb[0].mxu0
    %v678 = vpop.f32.mrb[0].mxu0
    %v679 = vadd.f32 0.0, %v678
    %v680 = vpop.f32.mrb[0].mxu0
    %681 = vdwg.mxu0
    %v682 = vmul.f32 %v676, 0.25
    %v683 = vmul.f32 %v679, 0.25
    %v684 = vsel %vm111, %v682, -inf
    %685 = vmax.xlane.f32.xlu0 %v684
    %v686 = vpop.xlane.xlu0 %685
    %v687 = vsel %vm111, %v683, -inf
    %688 = vmax.xlane.f32.xlu0 %v687
    %v689 = vpop.xlane.xlu0 %688
    %v690 = vsub.f32 %v682, %v686
    %v691 = vsub.f32 %v683, %v689
    %v692 = vmul.f32 %v690, 1.442695
    %v693 = vpow.pop %v692
    %v694 = vmul.f32 %v691, 1.442695
    %v695 = vpow.pop %v694
    %v696 = vsel %vm111, %v693, 0.0
    %697 = vadd.xlane.f32.xlu0 %v696
    %v698 = vpop.xlane.xlu0 %697
    %v699 = vsel %vm111, %v695, 0.0
    %700 = vadd.xlane.f32.xlu0 %v699
    %v701 = vpop.xlane.xlu0 %700
    %v702 = vrcp.pop %v698
    %v703 = vrcp.pop %v701
    %v704 = vmul.f32 %v693, %v702
    %v705 = vmul.f32 %v695, %v703
    %706 = vst.msk [vmem:[#allocation4 + $0x30] sm:$0xff] %vm111, %v704
    %707 = vst.msk [vmem:[#allocation4 + $0x38] sm:$0xff] %vm111, %v705
    %v708 = vpack.c.bf16 %v705, %v704
    %709 = vrot.lane.b32.xlu0 %v101, 48
    %v710 = vpop.permute.xlu0 %709
    %v713 = vsel %vm111, %v708, 0
    %715 = vmatprep.subr.bf16.mxu0 0
    %716 = vmatpush1.bf16.msra.mxu0 %v710
    %717 = vmatprep.subr.bf16.mxu0 0
    %718 = vmatpush1.bf16.msra.mxu0 0
    %719 = vmatprep.subr.bf16.mxu0 0
    %720 = vmatpush1.bf16.msra.mxu0 0
    %721 = vmatprep.subr.bf16.mxu0 0
    %722 = vmatpush1.bf16.msra.mxu0 0
    %723 = vmatprep.subr.bf16.mxu0 0
    %724 = vmatpush1.bf16.msra.mxu0 0
    %725 = vmatprep.subr.bf16.mxu0 0
    %726 = vmatpush1.bf16.msra.mxu0 0
    %727 = vmatprep.subr.bf16.mxu0 0
    %728 = vmatpush1.bf16.msra.mxu0 0
    %729 = vmatprep.subr.bf16.mxu0 0
    %730 = vmatpush1.bf16.msra.mxu0 0
    %731 = vmatprep.subr.bf16.mxu0 0
    %732 = vmatpush1.bf16.msra.mxu0 0
    %733 = vmatprep.subr.bf16.mxu0 0
    %734 = vmatpush1.bf16.msra.mxu0 0
    %735 = vmatprep.subr.bf16.mxu0 0
    %736 = vmatpush1.bf16.msra.mxu0 0
    %737 = vmatprep.subr.bf16.mxu0 0
    %738 = vmatpush1.bf16.msra.mxu0 0
    %739 = vmatprep.subr.bf16.mxu0 0
    %740 = vmatpush1.bf16.msra.mxu0 0
    %741 = vmatprep.subr.bf16.mxu0 0
    %742 = vmatpush1.bf16.msra.mxu0 0
    %743 = vmatprep.subr.bf16.mxu0 0
    %744 = vmatpush1.bf16.msra.mxu0 0
    %745 = vmatprep.subr.bf16.mxu0 0
    %746 = vmatpush1.bf16.msra.mxu0 0
    %747 = vmatprep.mubr.bf16.mxu0 0
    %748 = vmatmul.mubr.bf16.gmra.mrb[0].mxu0 %v713
    %v749 = vpop.f32.mrb[0].mxu0
    %v750 = vadd.f32 0.0, %v749
    %v751 = vpop.f32.mrb[0].mxu0
    %v752 = vpop.f32.mrb[0].mxu0
    %v753 = vadd.f32 0.0, %v752
    %v754 = vpop.f32.mrb[0].mxu0
    %755 = vdwg.mxu0
    %v756 = vpack.c.bf16 %v753, %v750
    %v758 = vsel %vm111, %v756, 0
    %760 = vmatprep.subr.bf16.mxu0 0
    %761 = vmatpush1.bf16.msra.mxu0 %v410
    %762 = vmatprep.subr.bf16.mxu0 0
    %763 = vmatpush1.bf16.msra.mxu0 0
    %764 = vmatprep.subr.bf16.mxu0 0
    %765 = vmatpush1.bf16.msra.mxu0 0
    %766 = vmatprep.subr.bf16.mxu0 0
    %767 = vmatpush1.bf16.msra.mxu0 0
    %768 = vmatprep.subr.bf16.mxu0 0
    %769 = vmatpush1.bf16.msra.mxu0 0
    %770 = vmatprep.subr.bf16.mxu0 0
    %771 = vmatpush1.bf16.msra.mxu0 0
    %772 = vmatprep.subr.bf16.mxu0 0
    %773 = vmatpush1.bf16.msra.mxu0 0
    %774 = vmatprep.subr.bf16.mxu0 0
    %775 = vmatpush1.bf16.msra.mxu0 0
    %776 = vmatprep.subr.bf16.mxu0 0
    %777 = vmatpush1.bf16.msra.mxu0 0
    %778 = vmatprep.subr.bf16.mxu0 0
    %779 = vmatpush1.bf16.msra.mxu0 0
    %780 = vmatprep.subr.bf16.mxu0 0
    %781 = vmatpush1.bf16.msra.mxu0 0
    %782 = vmatprep.subr.bf16.mxu0 0
    %783 = vmatpush1.bf16.msra.mxu0 0
    %784 = vmatprep.subr.bf16.mxu0 0
    %785 = vmatpush1.bf16.msra.mxu0 0
    %786 = vmatprep.subr.bf16.mxu0 0
    %787 = vmatpush1.bf16.msra.mxu0 0
    %788 = vmatprep.subr.bf16.mxu0 0
    %789 = vmatpush1.bf16.msra.mxu0 0
    %790 = vmatprep.subr.bf16.mxu0 0
    %791 = vmatpush1.bf16.msra.mxu0 0
    %792 = vmatprep.mubr.bf16.mxu0 0
    %793 = vmatmul.mubr.bf16.gmra.mrb[0].mxu0 %v758
    %v794 = vpop.f32.mrb[0].mxu0
    %v795 = vadd.f32 0.0, %v794
    %v796 = vpop.f32.mrb[0].mxu0
    %v797 = vpop.f32.mrb[0].mxu0
    %v798 = vadd.f32 0.0, %v797
    %v799 = vpop.f32.mrb[0].mxu0
    %800 = vdwg.mxu0
    %v801 = vadd.f32 %v629, %v795
    %v802 = vadd.f32 %v630, %v798
    %v803 = vld [vmem:[%s1 + $0x34] sm:$0x2]
    %v804 = vunpack.c.l.bf16 %v803
    %v805 = vsel %vm44, %v456, 0.0
    %806 = vadd.xlane.f32.xlu0 %v805
    %v807 = vpop.xlane.xlu0 %806
    %v808 = vsel %vm44, %v457, 0.0
    %809 = vadd.xlane.f32.xlu0 %v808
    %v810 = vpop.xlane.xlu0 %809
    %v811 = vsel %vm44, %v801, 0.0
    %812 = vadd.xlane.f32.xlu0 %v811
    %v813 = vpop.xlane.xlu0 %812
    %v814 = vsel %vm44, %v802, 0.0
    %815 = vadd.xlane.f32.xlu0 %v814
    %v816 = vpop.xlane.xlu0 %815
    %v817 = vrcp.pop 32.0
    %v818 = vmul.f32 %v807, %v817
    %v819 = vmul.f32 %v810, %v817
    %v820 = vmul.f32 %v813, %v817
    %v821 = vmul.f32 %v816, %v817
    %v822 = vsub.f32 %v456, %v818
    %v823 = vsub.f32 %v457, %v819
    %v824 = vsub.f32 %v801, %v820
    %v825 = vsub.f32 %v802, %v821
    %v826 = vmul.f32 %v822, %v822
    %v827 = vmul.f32 %v823, %v823
    %v828 = vmul.f32 %v824, %v824
    %v829 = vmul.f32 %v825, %v825
    %v830 = vsel %vm44, %v826, 0.0
    %831 = vadd.xlane.f32.xlu0 %v830
    %v832 = vpop.xlane.xlu0 %831
    %v833 = vsel %vm44, %v827, 0.0
    %834 = vadd.xlane.f32.xlu0 %v833
    %v835 = vpop.xlane.xlu0 %834
    %v836 = vsel %vm44, %v828, 0.0
    %837 = vadd.xlane.f32.xlu0 %v836
    %v838 = vpop.xlane.xlu0 %837
    %v839 = vsel %vm44, %v829, 0.0
    %840 = vadd.xlane.f32.xlu0 %v839
    %v841 = vpop.xlane.xlu0 %840
    %v842 = vmul.f32 %v832, %v817
    %v843 = vmul.f32 %v835, %v817
    %v844 = vmul.f32 %v838, %v817
    %v845 = vmul.f32 %v841, %v817
    %v846 = vadd.f32 %v842, 1e-05
    %v847 = vadd.f32 %v843, 1e-05
    %v848 = vadd.f32 %v844, 1e-05
    %v849 = vadd.f32 %v845, 1e-05
    %v850 = vrsqrt.pop %v846
    %v851 = vrsqrt.pop %v847
    %v852 = vrsqrt.pop %v848
    %v853 = vrsqrt.pop %v849
    %v854 = vmul.f32 %v822, %v850
    %v855 = vmul.f32 %v823, %v851
    %v856 = vmul.f32 %v824, %v852
    %v857 = vmul.f32 %v825, %v853
    %v858 = vlaneseq
    %v859 = vshrl.u32 %v858, 7
    %v860 = vsub.s32 2, %v859
    %v861 = vrot.slane %v804, %v860
    %v862 = vmul.f32 %v854, %v861
    %v863 = vmul.f32 %v855, %v861
    %v864 = vmul.f32 %v856, %v861
    %v865 = vmul.f32 %v857, %v861
    %867 = vrot.lane.b32.xlu0 %v861, 96
    %v868 = vpop.permute.xlu0 %867
    %v870 = vadd.f32 %v862, %v868
    %v871 = vadd.f32 %v863, %v868
    %v872 = vadd.f32 %v864, %v868
    %v873 = vadd.f32 %v865, %v868
    %v874 = vld [vmem:[%s1 + $0x10] sm:$0xf]
    %v875 = vld [vmem:[%s1 + $0x14] sm:$0xf]
    %v876 = vld [vmem:[%s1 + $0x18] sm:$0xf]
    %v877 = vld [vmem:[%s1 + $0x1c] sm:$0xf]
    %v878 = vpack.c.bf16 %v871, %v870
    %v879 = vpack.c.bf16 %v873, %v872
    %v880 = vlaneseq
    %v881 = vshrl.u32 %v880, 7
    %v882 = vsub.s32 3, %v881
    %v883 = vrot.slane %v804, %v882
    %v888 = vunpack.c.l.b16 %v874
    %v889 = vunpack.c.l.b16 %v875
    %v890 = vunpack.c.l.b16 %v876
    %v891 = vunpack.c.l.b16 %v877
    %v892 = vpack.c.b16 %v889, %v888
    %v893 = vpack.c.b16 %v891, %v890
    %v897 = vsel %vm44, %v878, 0
    %v900 = vsel %vm44, %v879, 0
    %902 = vmatprep.subr.bf16.mxu0 0
    %903 = vmatpush1.bf16.msra.mxu0 %v892
    %904 = vmatprep.subr.bf16.mxu0 0
    %905 = vmatpush1.bf16.msra.mxu0 %v893
    %906 = vmatprep.subr.bf16.mxu0 0
    %907 = vmatpush1.bf16.msra.mxu0 0
    %908 = vmatprep.subr.bf16.mxu0 0
    %909 = vmatpush1.bf16.msra.mxu0 0
    %910 = vmatprep.subr.bf16.mxu0 0
    %911 = vmatpush1.bf16.msra.mxu0 0
    %912 = vmatprep.subr.bf16.mxu0 0
    %913 = vmatpush1.bf16.msra.mxu0 0
    %914 = vmatprep.subr.bf16.mxu0 0
    %915 = vmatpush1.bf16.msra.mxu0 0
    %916 = vmatprep.subr.bf16.mxu0 0
    %917 = vmatpush1.bf16.msra.mxu0 0
    %918 = vmatprep.subr.bf16.mxu0 0
    %919 = vmatpush1.bf16.msra.mxu0 0
    %920 = vmatprep.subr.bf16.mxu0 0
    %921 = vmatpush1.bf16.msra.mxu0 0
    %922 = vmatprep.subr.bf16.mxu0 0
    %923 = vmatpush1.bf16.msra.mxu0 0
    %924 = vmatprep.subr.bf16.mxu0 0
    %925 = vmatpush1.bf16.msra.mxu0 0
    %926 = vmatprep.subr.bf16.mxu0 0
    %927 = vmatpush1.bf16.msra.mxu0 0
    %928 = vmatprep.subr.bf16.mxu0 0
    %929 = vmatpush1.bf16.msra.mxu0 0
    %930 = vmatprep.subr.bf16.mxu0 0
    %931 = vmatpush1.bf16.msra.mxu0 0
    %932 = vmatprep.subr.bf16.mxu0 0
    %933 = vmatpush1.bf16.msra.mxu0 0
    %934 = vmatprep.mubr.bf16.mxu0 0
    %935 = vmatmul.mubr.bf16.gmra.mrb[0].mxu0 %v897
    %v936 = vpop.f32.mrb[0].mxu0
    %v937 = vadd.f32 %v883, %v936
    %v938 = vpop.f32.mrb[0].mxu0
    %v939 = vpop.f32.mrb[0].mxu0
    %v940 = vadd.f32 %v883, %v939
    %v941 = vpop.f32.mrb[0].mxu0
    %942 = vmatprep.mubr.bf16.mxu0 0
    %943 = vmatmul.mubr.bf16.gmra.mrb[0].mxu0 %v900
    %v944 = vpop.f32.mrb[0].mxu0
    %v945 = vadd.f32 %v883, %v944
    %v946 = vpop.f32.mrb[0].mxu0
    %v947 = vpop.f32.mrb[0].mxu0
    %v948 = vadd.f32 %v883, %v947
    %v949 = vpop.f32.mrb[0].mxu0
    %950 = vdwg.mxu0
    %v951 = vmax.f32 %v937, 0.0
    %v952 = vmax.f32 %v940, 0.0
    %v953 = vmax.f32 %v945, 0.0
    %v954 = vmax.f32 %v948, 0.0
    %vm955 = vcmp.ne.f32.partialorder %v937, %v937
    %vm956 = vcmp.ne.f32.partialorder %v940, %v940
    %vm957 = vcmp.ne.f32.partialorder %v945, %v945
    %vm958 = vcmp.ne.f32.partialorder %v948, %v948
    %v959 = vadd.f32 %v937, 0.0
    %v960 = vadd.f32 %v940, 0.0
    %v961 = vadd.f32 %v945, 0.0
    %v962 = vadd.f32 %v948, 0.0
    %v963 = vand.u32 2147483647, %v937
    %v964 = vand.u32 2147483647, %v940
    %v965 = vand.u32 2147483647, %v945
    %v966 = vand.u32 2147483647, %v948
    %v967 = vsub.f32 0.0, %v963
    %v968 = vsub.f32 0.0, %v964
    %v969 = vsub.f32 0.0, %v965
    %v970 = vsub.f32 0.0, %v966
    %v971 = vmul.f32 %v967, 1.442695
    %v972 = vpow.pop %v971
    %v973 = vmul.f32 %v968, 1.442695
    %v974 = vpow.pop %v973
    %v975 = vmul.f32 %v969, 1.442695
    %v976 = vpow.pop %v975
    %v977 = vmul.f32 %v970, 1.442695
    %v978 = vpow.pop %v977
    %v979 = vadd.f32 %v972, 1.0
    %v980 = vlog2.pop %v979
    %v981 = vmul.f32 %v980, 0.6931472
    %v982 = vmul.f32 -0.5, %v972
    %v983 = vadd.f32 %v982, 1.0
    %v984 = vmul.f32 %v983, %v972
    %v985 = vand.u32 2147483647, %v972
    %vm986 = vcmp.lt.f32.partialorder %v985, 0.0004427343
    %v987 = vsel %vm986, %v984, %v981
    %v988 = vadd.f32 %v974, 1.0
    %v989 = vlog2.pop %v988
    %v990 = vmul.f32 %v989, 0.6931472
    %v991 = vmul.f32 -0.5, %v974
    %v992 = vadd.f32 %v991, 1.0
    %v993 = vmul.f32 %v992, %v974
    %v994 = vand.u32 2147483647, %v974
    %vm995 = vcmp.lt.f32.partialorder %v994, 0.0004427343
    %v996 = vsel %vm995, %v993, %v990
    %v997 = vadd.f32 %v976, 1.0
    %v998 = vlog2.pop %v997
    %v999 = vmul.f32 %v998, 0.6931472
    %v1000 = vmul.f32 -0.5, %v976
    %v1001 = vadd.f32 %v1000, 1.0
    %v1002 = vmul.f32 %v1001, %v976
    %v1003 = vand.u32 2147483647, %v976
    %vm1004 = vcmp.lt.f32.partialorder %v1003, 0.0004427343
    %v1005 = vsel %vm1004, %v1002, %v999
    %v1006 = vadd.f32 %v978, 1.0
    %v1007 = vlog2.pop %v1006
    %v1008 = vmul.f32 %v1007, 0.6931472
    %v1009 = vmul.f32 -0.5, %v978
    %v1010 = vadd.f32 %v1009, 1.0
    %v1011 = vmul.f32 %v1010, %v978
    %v1012 = vand.u32 2147483647, %v978
    %vm1013 = vcmp.lt.f32.partialorder %v1012, 0.0004427343
    %v1014 = vsel %vm1013, %v1011, %v1008
    %v1015 = vadd.f32 %v951, %v987
    %v1016 = vadd.f32 %v952, %v996
    %v1017 = vadd.f32 %v953, %v1005
    %v1018 = vadd.f32 %v954, %v1014
    %v1019 = vsel %vm955, %v959, %v1015
    %v1020 = vsel %vm956, %v960, %v1016
    %v1021 = vsel %vm957, %v961, %v1017
    %v1022 = vsel %vm958, %v962, %v1018
    %v1023 = vtanh.pop %v1019
    %v1024 = vtanh.pop %v1020
    %v1025 = vtanh.pop %v1021
    %v1026 = vtanh.pop %v1022
    %v1027 = vmul.f32 %v937, %v1023
    %v1028 = vmul.f32 %v940, %v1024
    %v1029 = vmul.f32 %v945, %v1025
    %v1030 = vmul.f32 %v948, %v1026
    %1033 = vrot.lane.b32.xlu0 %v1029, 8
    %v1034 = vpop.permute.xlu0 %1033
    %1035 = vrot.lane.b32.xlu0 %v1030, 8
    %v1036 = vpop.permute.xlu0 %1035
    %vm1039 = vcmask 64512
    %v1040 = vsel %vm1039, %v1027, %v1034
    %v1041 = vsel %vm1039, %v1028, %v1036
    %v1042 = vld [vmem:[%s1 + $0x30] sm:$0xf]
    %v1043 = vld [vmem:[%s1 + $0x34] sm:$0x1]
    %v1044 = vunpack.c.l.bf16 %v1042
    %v1045 = vunpack.c.l.bf16 %v1043
    %v1046 = vlaneseq
    %v1047 = vshrl.u32 %v1046, 7
    %v1048 = vadd.s32 %v1047, 8
    %v1049 = vrot.slane %v1040, 4
    %v1050 = vrot.slane %v1041, 4
    %vm1051 = vcmp.lt.s32.totalorder %v1047, 4
    %v1052 = vsel %vm1051, %v1049, %v1050
    %v1053 = vsel %vm1051, %v1050, %v1049
    %vm1054 = vcmp.ge.s32.totalorder %v1047, 4
    %vm1055 = vcmp.ge.s32.totalorder %v1048, 4
    %v1056 = vsel %vm1054, %v1053, 0.0
    %v1057 = vsel %vm1055, %v1052, 0.0
    %v1058 = vlaneseq
    %v1059 = vshrl.u32 %v1058, 7
    %v1060 = vsub.s32 0, %v1059
    %v1061 = vrot.slane %v1044, %v1060
    %v1062 = vmul.f32 %v1056, %v1061
    %v1063 = vmul.f32 %v1057, %v1061
    %1066 = vrot.lane.b32.xlu0 %v1062, 40
    %v1067 = vpop.permute.xlu0 %1066
    %1068 = vrot.lane.b32.xlu0 %v1063, 40
    %v1069 = vpop.permute.xlu0 %1068
    %v1072 = vadd.f32 %v883, %v1067
    %v1073 = vadd.f32 %v883, %v1069
    %v1074 = vrot.slane %v1040, 5
    %v1075 = vrot.slane %v1041, 5
    %vm1076 = vcmp.lt.s32.totalorder %v1047, 3
    %v1077 = vsel %vm1076, %v1074, %v1075
    %v1078 = vsel %vm1076, %v1075, %v1074
    %vm1079 = vcmp.ge.s32.totalorder %v1047, 3
    %vm1080 = vcmp.ge.s32.totalorder %v1048, 3
    %v1081 = vsel %vm1079, %v1078, 0.0
    %v1082 = vsel %vm1080, %v1077, 0.0
    %v1083 = vlaneseq
    %v1084 = vshrl.u32 %v1083, 7
    %v1085 = vsub.s32 1, %v1084
    %v1086 = vrot.slane %v1044, %v1085
    %v1087 = vmul.f32 %v1081, %v1086
    %v1088 = vmul.f32 %v1082, %v1086
    %1091 = vrot.lane.b32.xlu0 %v1087, 40
    %v1092 = vpop.permute.xlu0 %1091
    %1093 = vrot.lane.b32.xlu0 %v1088, 40
    %v1094 = vpop.permute.xlu0 %1093
    %v1097 = vadd.f32 %v1072, %v1092
    %v1098 = vadd.f32 %v1073, %v1094
    %v1099 = vrot.slane %v1040, 6
    %v1100 = vrot.slane %v1041, 6
    %vm1101 = vcmp.lt.s32.totalorder %v1047, 2
    %v1102 = vsel %vm1101, %v1099, %v1100
    %v1103 = vsel %vm1101, %v1100, %v1099
    %vm1104 = vcmp.ge.s32.totalorder %v1047, 2
    %vm1105 = vcmp.ge.s32.totalorder %v1048, 2
    %v1106 = vsel %vm1104, %v1103, 0.0
    %v1107 = vsel %vm1105, %v1102, 0.0
    %v1108 = vlaneseq
    %v1109 = vshrl.u32 %v1108, 7
    %v1110 = vsub.s32 2, %v1109
    %v1111 = vrot.slane %v1044, %v1110
    %v1112 = vmul.f32 %v1106, %v1111
    %v1113 = vmul.f32 %v1107, %v1111
    %1116 = vrot.lane.b32.xlu0 %v1112, 40
    %v1117 = vpop.permute.xlu0 %1116
    %1118 = vrot.lane.b32.xlu0 %v1113, 40
    %v1119 = vpop.permute.xlu0 %1118
    %v1122 = vadd.f32 %v1097, %v1117
    %v1123 = vadd.f32 %v1098, %v1119
    %v1124 = vrot.slane %v1040, 7
    %v1125 = vrot.slane %v1041, 7
    %vm1126 = vcmp.lt.s32.totalorder %v1047, 1
    %v1127 = vsel %vm1126, %v1124, %v1125
    %v1128 = vsel %vm1126, %v1125, %v1124
    %vm1129 = vcmp.ge.s32.totalorder %v1047, 1
    %vm1130 = vcmp.ge.s32.totalorder %v1048, 1
    %v1131 = vsel %vm1129, %v1128, 0.0
    %v1132 = vsel %vm1130, %v1127, 0.0
    %v1133 = vlaneseq
    %v1134 = vshrl.u32 %v1133, 7
    %v1135 = vsub.s32 3, %v1134
    %v1136 = vrot.slane %v1044, %v1135
    %v1137 = vmul.f32 %v1131, %v1136
    %v1138 = vmul.f32 %v1132, %v1136
    %1141 = vrot.lane.b32.xlu0 %v1137, 40
    %v1142 = vpop.permute.xlu0 %1141
    %1143 = vrot.lane.b32.xlu0 %v1138, 40
    %v1144 = vpop.permute.xlu0 %1143
    %v1147 = vadd.f32 %v1122, %v1142
    %v1148 = vadd.f32 %v1123, %v1144
    %v1149 = vlaneseq
    %v1150 = vshrl.u32 %v1149, 7
    %v1151 = vsub.s32 4, %v1150
    %v1152 = vrot.slane %v1044, %v1151
    %v1153 = vmul.f32 %v1040, %v1152
    %v1154 = vmul.f32 %v1041, %v1152
    %1157 = vrot.lane.b32.xlu0 %v1153, 40
    %v1158 = vpop.permute.xlu0 %1157
    %1159 = vrot.lane.b32.xlu0 %v1154, 40
    %v1160 = vpop.permute.xlu0 %1159
    %v1163 = vadd.f32 %v1147, %v1158
    %v1164 = vadd.f32 %v1148, %v1160
    %v1165 = vrot.slane %v1040, 1
    %v1166 = vrot.slane %v1041, 1
    %vm1167 = vcmp.lt.s32.totalorder %v1047, 7
    %v1168 = vsel %vm1167, %v1165, %v1166
    %v1169 = vsel %vm1167, %v1166, %v1165
    %vm1170 = vcmp.lt.s32.totalorder %v1047, 15
    %vm1171 = vcmp.lt.s32.totalorder %v1048, 15
    %v1172 = vsel %vm1170, %v1168, 0.0
    %v1173 = vsel %vm1171, %v1169, 0.0
    %v1174 = vlaneseq
    %v1175 = vshrl.u32 %v1174, 7
    %v1176 = vsub.s32 5, %v1175
    %v1177 = vrot.slane %v1044, %v1176
    %v1178 = vmul.f32 %v1172, %v1177
    %v1179 = vmul.f32 %v1173, %v1177
    %1182 = vrot.lane.b32.xlu0 %v1178, 40
    %v1183 = vpop.permute.xlu0 %1182
    %1184 = vrot.lane.b32.xlu0 %v1179, 40
    %v1185 = vpop.permute.xlu0 %1184
    %v1188 = vadd.f32 %v1163, %v1183
    %v1189 = vadd.f32 %v1164, %v1185
    %v1190 = vrot.slane %v1040, 2
    %v1191 = vrot.slane %v1041, 2
    %vm1192 = vcmp.lt.s32.totalorder %v1047, 6
    %v1193 = vsel %vm1192, %v1190, %v1191
    %v1194 = vsel %vm1192, %v1191, %v1190
    %vm1195 = vcmp.lt.s32.totalorder %v1047, 14
    %vm1196 = vcmp.lt.s32.totalorder %v1048, 14
    %v1197 = vsel %vm1195, %v1193, 0.0
    %v1198 = vsel %vm1196, %v1194, 0.0
    %v1199 = vlaneseq
    %v1200 = vshrl.u32 %v1199, 7
    %v1201 = vsub.s32 6, %v1200
    %v1202 = vrot.slane %v1044, %v1201
    %v1203 = vmul.f32 %v1197, %v1202
    %v1204 = vmul.f32 %v1198, %v1202
    %1207 = vrot.lane.b32.xlu0 %v1203, 40
    %v1208 = vpop.permute.xlu0 %1207
    %1209 = vrot.lane.b32.xlu0 %v1204, 40
    %v1210 = vpop.permute.xlu0 %1209
    %v1213 = vadd.f32 %v1188, %v1208
    %v1214 = vadd.f32 %v1189, %v1210
    %v1215 = vrot.slane %v1040, 3
    %v1216 = vrot.slane %v1041, 3
    %vm1217 = vcmp.lt.s32.totalorder %v1047, 5
    %v1218 = vsel %vm1217, %v1215, %v1216
    %v1219 = vsel %vm1217, %v1216, %v1215
    %vm1220 = vcmp.lt.s32.totalorder %v1047, 13
    %vm1221 = vcmp.lt.s32.totalorder %v1048, 13
    %v1222 = vsel %vm1220, %v1218, 0.0
    %v1223 = vsel %vm1221, %v1219, 0.0
    %v1224 = vlaneseq
    %v1225 = vshrl.u32 %v1224, 7
    %v1226 = vsub.s32 7, %v1225
    %v1227 = vrot.slane %v1044, %v1226
    %v1228 = vmul.f32 %v1222, %v1227
    %v1229 = vmul.f32 %v1223, %v1227
    %1232 = vrot.lane.b32.xlu0 %v1228, 40
    %v1233 = vpop.permute.xlu0 %1232
    %1234 = vrot.lane.b32.xlu0 %v1229, 40
    %v1235 = vpop.permute.xlu0 %1234
    %v1238 = vadd.f32 %v1213, %v1233
    %v1239 = vadd.f32 %v1214, %v1235
    %vm1240 = vcmp.lt.s32.totalorder %v1047, 12
    %vm1241 = vcmp.lt.s32.totalorder %v1048, 12
    %v1242 = vsel %vm1240, %v1052, 0.0
    %v1243 = vsel %vm1241, %v1053, 0.0
    %v1244 = vlaneseq
    %v1245 = vshrl.u32 %v1244, 7
    %v1246 = vsub.s32 0, %v1245
    %v1247 = vrot.slane %v1045, %v1246
    %v1248 = vmul.f32 %v1242, %v1247
    %v1249 = vmul.f32 %v1243, %v1247
    %1252 = vrot.lane.b32.xlu0 %v1248, 40
    %v1253 = vpop.permute.xlu0 %1252
    %1254 = vrot.lane.b32.xlu0 %v1249, 40
    %v1255 = vpop.permute.xlu0 %1254
    %v1258 = vadd.f32 %v1238, %v1253
    %v1259 = vadd.f32 %v1239, %v1255
    %v1260 = vld [vmem:[%s1 + $0x28] sm:$0xf]
    %v1261 = vld [vmem:[%s1 + $0x2c] sm:$0xf]
    %v1262 = vpack.c.bf16 %v1259, %v1258
    %1264 = vrot.lane.b32.xlu0 %v1262, 88
    %v1265 = vpop.permute.xlu0 %1264
    %v1268 = vunpack.c.l.b16 %v1260
    %v1269 = vunpack.c.l.b16 %v1261
    %v1270 = vpack.c.b16 %v1269, %v1268
    %1273 = vrot.lane.b32.xlu0 %v883, 72
    %v1274 = vpop.permute.xlu0 %1273
    %v1277 = vsel %vm111, %v1265, 0
    %1279 = vmatprep.subr.bf16.mxu0 0
    %1280 = vmatpush1.bf16.msra.mxu0 %v1270
    %1281 = vmatprep.subr.bf16.mxu0 0
    %1282 = vmatpush1.bf16.msra.mxu0 0
    %1283 = vmatprep.subr.bf16.mxu0 0
    %1284 = vmatpush1.bf16.msra.mxu0 0
    %1285 = vmatprep.subr.bf16.mxu0 0
    %1286 = vmatpush1.bf16.msra.mxu0 0
    %1287 = vmatprep.subr.bf16.mxu0 0
    %1288 = vmatpush1.bf16.msra.mxu0 0
    %1289 = vmatprep.subr.bf16.mxu0 0
    %1290 = vmatpush1.bf16.msra.mxu0 0
    %1291 = vmatprep.subr.bf16.mxu0 0
    %1292 = vmatpush1.bf16.msra.mxu0 0
    %1293 = vmatprep.subr.bf16.mxu0 0
    %1294 = vmatpush1.bf16.msra.mxu0 0
    %1295 = vmatprep.subr.bf16.mxu0 0
    %1296 = vmatpush1.bf16.msra.mxu0 0
    %1297 = vmatprep.subr.bf16.mxu0 0
    %1298 = vmatpush1.bf16.msra.mxu0 0
    %1299 = vmatprep.subr.bf16.mxu0 0
    %1300 = vmatpush1.bf16.msra.mxu0 0
    %1301 = vmatprep.subr.bf16.mxu0 0
    %1302 = vmatpush1.bf16.msra.mxu0 0
    %1303 = vmatprep.subr.bf16.mxu0 0
    %1304 = vmatpush1.bf16.msra.mxu0 0
    %1305 = vmatprep.subr.bf16.mxu0 0
    %1306 = vmatpush1.bf16.msra.mxu0 0
    %1307 = vmatprep.subr.bf16.mxu0 0
    %1308 = vmatpush1.bf16.msra.mxu0 0
    %1309 = vmatprep.subr.bf16.mxu0 0
    %1310 = vmatpush1.bf16.msra.mxu0 0
    %1311 = vmatprep.mubr.bf16.mxu0 0
    %1312 = vmatmul.mubr.bf16.gmra.mrb[0].mxu0 %v1277
    %v1313 = vpop.f32.mrb[0].mxu0
    %v1314 = vadd.f32 %v1274, %v1313
    %v1315 = vpop.f32.mrb[0].mxu0
    %v1316 = vpop.f32.mrb[0].mxu0
    %v1317 = vadd.f32 %v1274, %v1316
    %v1318 = vpop.f32.mrb[0].mxu0
    %1319 = vdwg.mxu0
    %v1320 = vld [vmem:[%s1 + $0x20] sm:$0xf]
    %v1321 = vpack.c.bf16 %v1317, %v1314
    %1322 = vrot.lane.b32.xlu0 %v883, 120
    %v1323 = vpop.permute.xlu0 %1322
    %v1326 = vsel %vm1039, %v1321, 0
    %vm1328 = vcmask 1043456
    %v1330 = vsel %vm1328, %v1320, 0
    %1332 = vmatprep.subr.bf16.mxu0 0
    %1333 = vmatpush1.bf16.msra.mxu0 %v1330
    %1334 = vmatprep.subr.bf16.mxu0 0
    %1335 = vmatpush1.bf16.msra.mxu0 0
    %1336 = vmatprep.subr.bf16.mxu0 0
    %1337 = vmatpush1.bf16.msra.mxu0 0
    %1338 = vmatprep.subr.bf16.mxu0 0
    %1339 = vmatpush1.bf16.msra.mxu0 0
    %1340 = vmatprep.subr.bf16.mxu0 0
    %1341 = vmatpush1.bf16.msra.mxu0 0
    %1342 = vmatprep.subr.bf16.mxu0 0
    %1343 = vmatpush1.bf16.msra.mxu0 0
    %1344 = vmatprep.subr.bf16.mxu0 0
    %1345 = vmatpush1.bf16.msra.mxu0 0
    %1346 = vmatprep.subr.bf16.mxu0 0
    %1347 = vmatpush1.bf16.msra.mxu0 0
    %1348 = vmatprep.subr.bf16.mxu0 0
    %1349 = vmatpush1.bf16.msra.mxu0 0
    %1350 = vmatprep.subr.bf16.mxu0 0
    %1351 = vmatpush1.bf16.msra.mxu0 0
    %1352 = vmatprep.subr.bf16.mxu0 0
    %1353 = vmatpush1.bf16.msra.mxu0 0
    %1354 = vmatprep.subr.bf16.mxu0 0
    %1355 = vmatpush1.bf16.msra.mxu0 0
    %1356 = vmatprep.subr.bf16.mxu0 0
    %1357 = vmatpush1.bf16.msra.mxu0 0
    %1358 = vmatprep.subr.bf16.mxu0 0
    %1359 = vmatpush1.bf16.msra.mxu0 0
    %1360 = vmatprep.subr.bf16.mxu0 0
    %1361 = vmatpush1.bf16.msra.mxu0 0
    %1362 = vmatprep.subr.bf16.mxu0 0
    %1363 = vmatpush1.bf16.msra.mxu0 0
    %1364 = vmatprep.mubr.bf16.mxu0 0
    %1365 = vmatmul.mubr.bf16.gmra.mrb[0].mxu0 %v1326
    %v1366 = vpop.f32.mrb[0].mxu0
    %v1367 = vadd.f32 %v1323, %v1366
    %v1368 = vpop.f32.mrb[0].mxu0
    %v1369 = vpop.f32.mrb[0].mxu0
    %v1370 = vadd.f32 %v1323, %v1369
    %v1371 = vpop.f32.mrb[0].mxu0
    %1372 = vdwg.mxu0
    %v1373 = vadd.f32 %v1367, %v870
    %v1374 = vadd.f32 %v1370, %v871
    %v1375 = vsel %vm44, %v1373, 0.0
    %1376 = vadd.xlane.f32.xlu0 %v1375
    %v1377 = vpop.xlane.xlu0 %1376
    %v1378 = vsel %vm44, %v1374, 0.0
    %1379 = vadd.xlane.f32.xlu0 %v1378
    %v1380 = vpop.xlane.xlu0 %1379
    %v1381 = vmul.f32 %v1377, %v817
    %v1382 = vmul.f32 %v1380, %v817
    %v1383 = vsub.f32 %v1373, %v1381
    %v1384 = vsub.f32 %v1374, %v1382
    %v1385 = vmul.f32 %v1383, %v1383
    %v1386 = vmul.f32 %v1384, %v1384
    %v1387 = vsel %vm44, %v1385, 0.0
    %1388 = vadd.xlane.f32.xlu0 %v1387
    %v1389 = vpop.xlane.xlu0 %1388
    %v1390 = vsel %vm44, %v1386, 0.0
    %1391 = vadd.xlane.f32.xlu0 %v1390
    %v1392 = vpop.xlane.xlu0 %1391
    %v1393 = vmul.f32 %v1389, %v817
    %v1394 = vmul.f32 %v1392, %v817
    %v1395 = vadd.f32 %v1393, 1e-05
    %v1396 = vadd.f32 %v1394, 1e-05
    %v1397 = vrsqrt.pop %v1395
    %v1398 = vrsqrt.pop %v1396
    %v1399 = vmul.f32 %v1383, %v1397
    %v1400 = vmul.f32 %v1384, %v1398
    %1401 = vrot.lane.b32.xlu0 %v861, 64
    %v1402 = vpop.permute.xlu0 %1401
    %v1404 = vmul.f32 %v1399, %v1402
    %v1405 = vmul.f32 %v1400, %v1402
    %1406 = vrot.lane.b32.xlu0 %v861, 32
    %v1407 = vpop.permute.xlu0 %1406
    %v1409 = vadd.f32 %v1404, %v1407
    %v1410 = vadd.f32 %v1405, %v1407
    %1411 = vst.msk [vmem:[#allocation2] sm:$0xff] %vm44, %v1409
    %1412 = vst.msk [vmem:[#allocation2 + $0x8] sm:$0xff] %vm44, %v1410
    %1414 = vrot.lane.b32.xlu0 %v1321, 120
    %v1415 = vpop.permute.xlu0 %1414
    %v1417 = vsel %vm1039, %v1415, 0
    %1419 = vmatprep.subr.bf16.mxu0 0
    %1420 = vmatpush1.bf16.msra.mxu0 %v1330
    %1421 = vmatprep.subr.bf16.mxu0 0
    %1422 = vmatpush1.bf16.msra.mxu0 0
    %1423 = vmatprep.subr.bf16.mxu0 0
    %1424 = vmatpush1.bf16.msra.mxu0 0
    %1425 = vmatprep.subr.bf16.mxu0 0
    %1426 = vmatpush1.bf16.msra.mxu0 0
    %1427 = vmatprep.subr.bf16.mxu0 0
    %1428 = vmatpush1.bf16.msra.mxu0 0
    %1429 = vmatprep.subr.bf16.mxu0 0
    %1430 = vmatpush1.bf16.msra.mxu0 0
    %1431 = vmatprep.subr.bf16.mxu0 0
    %1432 = vmatpush1.bf16.msra.mxu0 0
    %1433 = vmatprep.subr.bf16.mxu0 0
    %1434 = vmatpush1.bf16.msra.mxu0 0
    %1435 = vmatprep.subr.bf16.mxu0 0
    %1436 = vmatpush1.bf16.msra.mxu0 0
    %1437 = vmatprep.subr.bf16.mxu0 0
    %1438 = vmatpush1.bf16.msra.mxu0 0
    %1439 = vmatprep.subr.bf16.mxu0 0
    %1440 = vmatpush1.bf16.msra.mxu0 0
    %1441 = vmatprep.subr.bf16.mxu0 0
    %1442 = vmatpush1.bf16.msra.mxu0 0
    %1443 = vmatprep.subr.bf16.mxu0 0
    %1444 = vmatpush1.bf16.msra.mxu0 0
    %1445 = vmatprep.subr.bf16.mxu0 0
    %1446 = vmatpush1.bf16.msra.mxu0 0
    %1447 = vmatprep.subr.bf16.mxu0 0
    %1448 = vmatpush1.bf16.msra.mxu0 0
    %1449 = vmatprep.subr.bf16.mxu0 0
    %1450 = vmatpush1.bf16.msra.mxu0 0
    %1451 = vmatprep.mubr.bf16.mxu0 0
    %1452 = vmatmul.mubr.bf16.gmra.mrb[0].mxu0 %v1417
    %v1453 = vpop.f32.mrb[0].mxu0
    %v1454 = vadd.f32 %v1323, %v1453
    %v1455 = vpop.f32.mrb[0].mxu0
    %v1456 = vpop.f32.mrb[0].mxu0
    %v1457 = vadd.f32 %v1323, %v1456
    %v1458 = vpop.f32.mrb[0].mxu0
    %1459 = vdwg.mxu0
    %v1460 = vadd.f32 %v1454, %v872
    %v1461 = vadd.f32 %v1457, %v873
    %v1462 = vsel %vm44, %v1460, 0.0
    %1463 = vadd.xlane.f32.xlu0 %v1462
    %v1464 = vpop.xlane.xlu0 %1463
    %v1465 = vsel %vm44, %v1461, 0.0
    %1466 = vadd.xlane.f32.xlu0 %v1465
    %v1467 = vpop.xlane.xlu0 %1466
    %v1468 = vmul.f32 %v1464, %v817
    %v1469 = vmul.f32 %v1467, %v817
    %v1470 = vsub.f32 %v1460, %v1468
    %v1471 = vsub.f32 %v1461, %v1469
    %v1472 = vmul.f32 %v1470, %v1470
    %v1473 = vmul.f32 %v1471, %v1471
    %v1474 = vsel %vm44, %v1472, 0.0
    %1475 = vadd.xlane.f32.xlu0 %v1474
    %v1476 = vpop.xlane.xlu0 %1475
    %v1477 = vsel %vm44, %v1473, 0.0
    %1478 = vadd.xlane.f32.xlu0 %v1477
    %v1479 = vpop.xlane.xlu0 %1478
    %v1480 = vmul.f32 %v1476, %v817
    %v1481 = vmul.f32 %v1479, %v817
    %v1482 = vadd.f32 %v1480, 1e-05
    %v1483 = vadd.f32 %v1481, 1e-05
    %v1484 = vrsqrt.pop %v1482
    %v1485 = vrsqrt.pop %v1483
    %v1486 = vmul.f32 %v1470, %v1484
    %v1487 = vmul.f32 %v1471, %v1485
    %v1488 = vmul.f32 %v1486, %v1402
    %v1489 = vmul.f32 %v1487, %v1402
    %v1490 = vadd.f32 %v1488, %v1407
    %v1491 = vadd.f32 %v1489, %v1407
    %1492 = vst.msk [vmem:[#allocation2 + $0x10] sm:$0xff] %vm44, %v1490
    %1493 = vst.msk [vmem:[#allocation2 + $0x18] sm:$0xff] %vm44, %v1491
    // Predicated region
    $region10: #{scfft_block.1} parent=1 // pred_check
      _
    $region11: #{scfft_block.1} parent=1 // pred_check_branch
      %1495 = sbr.rel (0) target = $region13
    $region12: #{scfft_block.1} parent=1 // pred_region
      %s1497 = ssub.s32 512, 512
      %1498 = vsyncadd [#allocation3], %s1497
      %s1499 = sshll.u32 [#allocation2], 4
      %s1500 = int_to_ptr.vmem [resolvable:$true] %s1499
      %1505 = dma.vmem_to_hbm [thread:$0]  %s1500, 512, %s2, [#allocation3], 128, 128, 8
    $region13: #{scfft_block.1} parent=1 // pred_fallthru
      _
    // Predicated region
    $region14: #{scfft_block.1} parent=1 // pred_check
      _
    $region15: #{scfft_block.1} parent=1 // pred_check_branch
      %1507 = sbr.rel (0) target = $region17
    $region16: #{scfft_block.1} parent=1 // pred_region
      %s1509 = ssub.s32 1024, 1024
      %1510 = vsyncadd [#allocation5], %s1509
      %s1511 = sshll.u32 [#allocation4], 4
      %s1512 = int_to_ptr.vmem [resolvable:$true] %s1511
      %1517 = dma.vmem_to_hbm [thread:$0]  %s1512, 1024, %s3, [#allocation5], 128, 128, 8
    $region17: #{scfft_block.1} parent=1 // pred_fallthru
      _
    // Predicated region
    $region18: #{scfft_block.1} parent=1 // pred_check
      _
    $region19: #{scfft_block.1} parent=1 // pred_check_branch
      %1519 = sbr.rel (0) target = $region21
    $region20: #{scfft_block.1} parent=1 // pred_region
      %1520 = dma.done [#allocation3], 512
    $region21: #{scfft_block.1} parent=1 // pred_fallthru
      _
    // Predicated region
    $region22: #{scfft_block.1} parent=1 // pred_check
      _
    $region23: #{scfft_block.1} parent=1 // pred_check_branch
      %1522 = sbr.rel (0) target = $region25
    $region24: #{scfft_block.1} parent=1 // pred_region
      %1523 = dma.done [#allocation5], 1024
    $region25: #{scfft_block.1} parent=1 // pred_fallthru
      _
    %1524 = vsyncpa [#allocation3], 1
    %1525 = vsyncpa [#allocation5], 1

</llo_original>
